<compile_context>
chip_gen: v7x
topology: tpu7x:2x2x1
jax: 0.10.0
libtpu: 0.0.40
codegen_flags: <defaults>
</compile_context>

<pallas_src>
import functools
import math

import jax
import jax.numpy as jnp
from jax.experimental import pallas as pl
from jax.experimental.pallas import tpu as pltpu

# ---------------- config (CadenzaTransformerConfig) ----------------
D_MODEL = 32
N_HEAD = 4
N_LAYER = 2          # n_attn_layer
N_TOKEN = 64
D_FF = 64            # d_feedforward
EPS = 1e-5           # PyTorch LayerNorm default eps
HEAD_DIM = D_MODEL // N_HEAD
V_PAD = 128          # lane-dense padded vocab width for the final fc
MAX_POSITIONS = 5000 # matches PositionalEncoding(max_len=5000)
_TARGET_ROWS = 512   # target flattened rows per grid block (DMA/MXU coarsening)


def _layernorm(x, gamma, beta):
    mu = jnp.mean(x, axis=-1, keepdims=True)
    var = jnp.mean((x - mu) ** 2, axis=-1, keepdims=True)
    return (x - mu) * jax.lax.rsqrt(var + EPS) * gamma + beta


# ---------------- fused Pallas kernel ----------------

def fused_forward_kernel(tok_ref, pe_ref, emb_ref,
                         wqkv_ref, wo_ref, w1_ref, w2_ref, vec_ref,
                         fcw_ref, fcb_ref,
                         o_ref, *, seq_len):
    """Entire CadenzaTransformer forward for one block of batch rows.

    tok_ref : (BT, 1)   int32   flattened token ids for this block (BT = Bt*S)
    pe_ref  : (BT, D)   f32     positional-encoding rows (PyTorch batch-index quirk)
    emb_ref : (V, D)    f32     embedding table with sqrt(d_model) pre-folded
    wqkv/wo/w1/w2 : (L, ...)    bf16 pre-transposed, layer-stacked weights
    vec_ref : (L, 8, 128) f32   packed biases + layernorm gamma/beta
    fcw_ref : (D, 128)  bf16    final fc weight (lane-padded)
    fcb_ref : (1, 128)  f32     final fc bias (lane-padded)
    o_ref   : (BT, 128) f32     logits (lane-dense, wrapper slices to n_token)
    """
    D, H, Hd = D_MODEL, N_HEAD, HEAD_DIM
    BT = tok_ref.shape[0]
    Bt = BT // seq_len
    scale = 1.0 / math.sqrt(Hd)

    # ---- in-kernel embedding gather (one-hot matmul) + positional encoding ----
    ids = tok_ref[...]                                               # (BT, 1) int32
    vocab_iota = jax.lax.broadcasted_iota(jnp.int32, (BT, N_TOKEN), 1)
    one_hot = jnp.where(vocab_iota == ids, 1.0, 0.0)                 # (BT, V) f32, exact
    x = jnp.dot(one_hot, emb_ref[...],
                preferred_element_type=jnp.float32) + pe_ref[...]    # (BT, D) f32
    # TODO(synk): nn.Dropout (pos-enc + encoder layers) is stochastic; eval-mode identity here.

    for l in range(N_LAYER):                                         # static layer loop
        vecs = vec_ref[l]                                            # (8, 128) f32
        bqkv = vecs[0:1, 0:3 * D]
        bo   = vecs[1:2, 0:D]
        b1   = vecs[2:3, 0:D_FF]
        b2   = vecs[3:4, 0:D]
        g1   = vecs[4:5, 0:D]
        be1  = vecs[5:6, 0:D]
        g2   = vecs[6:7, 0:D]
        be2  = vecs[7:8, 0:D]

        # ---- self-attention (post-norm, norm_first=False, no mask) ----
        # fused QKV projection over the whole (BT, D) slab: one MXU matmul
        qkv = jnp.dot(x.astype(jnp.bfloat16), wqkv_ref[l],
                      preferred_element_type=jnp.float32) + bqkv     # (BT, 3D) f32
        q = qkv[:, 0 * D:1 * D].reshape(Bt, seq_len, D)
        k = qkv[:, 1 * D:2 * D].reshape(Bt, seq_len, D)
        v = qkv[:, 2 * D:3 * D].reshape(Bt, seq_len, D)

        head_outs = []
        for h in range(H):                                           # static head loop,
            lo = h * Hd                                              # batched over batch rows
            qh = (q[:, :, lo:lo + Hd] * scale).astype(jnp.bfloat16)
            kh = k[:, :, lo:lo + Hd].astype(jnp.bfloat16)
            vh = v[:, :, lo:lo + Hd].astype(jnp.bfloat16)
            s = jnp.einsum('bqd,bkd->bqk', qh, kh,
                           preferred_element_type=jnp.float32)       # (Bt, S, S) f32
            s = s - jnp.max(s, axis=-1, keepdims=True)
            p = jnp.exp(s)
            p = p * pl.reciprocal(jnp.sum(p, axis=-1, keepdims=True), approx=True)
            head_outs.append(jnp.einsum('bqk,bkd->bqd', p.astype(jnp.bfloat16), vh,
                                        preferred_element_type=jnp.float32))
        attn = jnp.concatenate(head_outs, axis=-1).reshape(BT, D)    # (BT, D) f32

        attn = jnp.dot(attn.astype(jnp.bfloat16), wo_ref[l],
                       preferred_element_type=jnp.float32) + bo
        x = _layernorm(x + attn, g1, be1)

        # ---- feed-forward ----
        ff = jnp.maximum(
            jnp.dot(x.astype(jnp.bfloat16), w1_ref[l],
                    preferred_element_type=jnp.float32) + b1, 0.0)
        ff = jnp.dot(ff.astype(jnp.bfloat16), w2_ref[l],
                     preferred_element_type=jnp.float32) + b2
        x = _layernorm(x + ff, g2, be2)

    # ---- final fc, lane-dense (128 lanes, BT rows multiple of 8 -> unmasked stores) ----
    o_ref[...] = jnp.dot(x.astype(jnp.bfloat16), fcw_ref[...],
                         preferred_element_type=jnp.float32) + fcb_ref[...]


# ---------------- wrapper (single pallas_call) ----------------

def _choose_block_b(batch, seq):
    """Batch rows per grid block: coarse enough to amortize per-step overhead,
    but keep >= 2 blocks when batch > 1 so both v7x TensorCores get work."""
    bb = max(1, min(batch, max(1, _TARGET_ROWS // max(seq, 1))))
    if batch > 1:
        bb = min(bb, pl.cdiv(batch, 2))
    bb = max(bb, 1)
    while (bb * seq) % 8 != 0:     # keep flattened block rows sublane-aligned
        bb += 1
    return bb


def run_fused_forward(token_ids, prep, block_b=None):
    B, S = token_ids.shape
    D = D_MODEL

    if block_b is None:
        block_b = _choose_block_b(B, S)
    n_blocks = pl.cdiv(B, block_b)
    B_pad = n_blocks * block_b
    BT = block_b * S                                   # flattened rows per grid block

    tok = token_ids.astype(jnp.int32)
    pe = prep["pe_table"][:B]                          # (B, D): pe indexed by BATCH (PyTorch quirk)
    if B_pad != B:
        tok = jnp.pad(tok, ((0, B_pad - B), (0, 0)))
        pe = jnp.pad(pe, ((0, B_pad - B), (0, 0)))
    tok_flat = tok.reshape(B_pad * S, 1)               # (B_pad*S, 1) int32
    pe_flat = jnp.repeat(pe, S, axis=0)                # (B_pad*S, D): row b*S+s gets pe[b]

    weights = (prep["emb_scaled"], prep["wqkv_t"], prep["wo_t"], prep["w1_t"],
               prep["w2_t"], prep["vecs"], prep["fcw_t"], prep["fcb"])

    in_specs = [
        pl.BlockSpec((BT, 1), lambda b: (b, 0)),       # token ids (flattened rows)
        pl.BlockSpec((BT, D), lambda b: (b, 0)),       # positional-encoding rows
    ]
    for w in weights:                                  # tiny weights: whole array VMEM-resident,
        nd = w.ndim                                    # constant block index -> fetched once
        in_specs.append(pl.BlockSpec(w.shape, lambda b, _nd=nd: (0,) * _nd))

    kernel = functools.partial(fused_forward_kernel, seq_len=S)

    out = pl.pallas_call(
        kernel,
        out_shape=jax.ShapeDtypeStruct((B_pad * S, V_PAD), jnp.float32),
        grid_spec=pltpu.PrefetchScalarGridSpec(
            num_scalar_prefetch=0, grid=(n_blocks,),
            in_specs=in_specs,
            out_specs=pl.BlockSpec((BT, V_PAD), lambda b: (b, 0))),
        compiler_params=pltpu.CompilerParams(dimension_semantics=("parallel",)),
    )(tok_flat, pe_flat, *weights)

    return out.reshape(B_pad, S, V_PAD)[:B, :, :N_TOKEN]


# ---------------- parameters / forward ----------------

def positional_encoding(n_pos, d_model):
    position = jnp.arange(n_pos, dtype=jnp.float32)[:, None]
    div_term = jnp.exp(jnp.arange(0, d_model, 2, dtype=jnp.float32)
                       * (-math.log(10000.0) / d_model))
    pe = jnp.zeros((n_pos, d_model), jnp.float32)
    pe = pe.at[:, 0::2].set(jnp.sin(position * div_term))
    pe = pe.at[:, 1::2].set(jnp.cos(position * div_term))
    return pe


def init_params(key):
    keys = jax.random.split(key, 2 + 8 * N_LAYER)
    params = {
        "embedding": jax.random.normal(keys[0], (N_TOKEN, D_MODEL), jnp.float32),
        "fc_w": 0.1 * jax.random.normal(keys[1], (N_TOKEN, D_MODEL), jnp.float32),
        "fc_b": jnp.zeros((1, N_TOKEN), jnp.float32),
        "layers": [],
    }
    ki = 2
    for _ in range(N_LAYER):
        lp = {
            "wqkv": 0.1 * jax.random.normal(keys[ki + 0], (3 * D_MODEL, D_MODEL), jnp.float32),
            "bqkv": 0.01 * jax.random.normal(keys[ki + 1], (1, 3 * D_MODEL), jnp.float32),
            "wo":   0.1 * jax.random.normal(keys[ki + 2], (D_MODEL, D_MODEL), jnp.float32),
            "bo":   0.01 * jax.random.normal(keys[ki + 3], (1, D_MODEL), jnp.float32),
            "w1":   0.1 * jax.random.normal(keys[ki + 4], (D_FF, D_MODEL), jnp.float32),
            "b1":   0.01 * jax.random.normal(keys[ki + 5], (1, D_FF), jnp.float32),
            "w2":   0.1 * jax.random.normal(keys[ki + 6], (D_MODEL, D_FF), jnp.float32),
            "b2":   0.01 * jax.random.normal(keys[ki + 7], (1, D_MODEL), jnp.float32),
            "g1": jnp.ones((1, D_MODEL), jnp.float32), "be1": jnp.zeros((1, D_MODEL), jnp.float32),
            "g2": jnp.ones((1, D_MODEL), jnp.float32), "be2": jnp.zeros((1, D_MODEL), jnp.float32),
        }
        ki += 8
        params["layers"].append(lp)
    return params


def prepare_params(params):
    """One-time prep: pre-transpose to x@W layout, stack layers, cast matmul
    weights to bf16, fold sqrt(d_model) into the embedding table, precompute
    the positional-encoding table, pack biases/LN vectors into one slab,
    pad the fc to 128 lanes."""
    layers = params["layers"]
    L = len(layers)

    def stack_w(name):
        return jnp.stack([lp[name].T for lp in layers], 0).astype(jnp.bfloat16)

    # pack the 8 per-layer (1, width) vectors into one (L, 8, 128) f32 slab
    vecs = jnp.zeros((L, 8, 128), jnp.float32)
    for i, lp in enumerate(layers):
        vecs = vecs.at[i, 0, :3 * D_MODEL].set(lp["bqkv"][0])
        vecs = vecs.at[i, 1, :D_MODEL].set(lp["bo"][0])
        vecs = vecs.at[i, 2, :D_FF].set(lp["b1"][0])
        vecs = vecs.at[i, 3, :D_MODEL].set(lp["b2"][0])
        vecs = vecs.at[i, 4, :D_MODEL].set(lp["g1"][0])
        vecs = vecs.at[i, 5, :D_MODEL].set(lp["be1"][0])
        vecs = vecs.at[i, 6, :D_MODEL].set(lp["g2"][0])
        vecs = vecs.at[i, 7, :D_MODEL].set(lp["be2"][0])

    return {
        "emb_scaled": params["embedding"] * math.sqrt(D_MODEL),       # f32, sqrt pre-folded
        "pe_table": positional_encoding(MAX_POSITIONS, D_MODEL),      # sin/cos built once
        "wqkv_t": stack_w("wqkv"),   # (L, D, 3D)   bf16
        "wo_t":   stack_w("wo"),     # (L, D, D)    bf16
        "w1_t":   stack_w("w1"),     # (L, D, Dff)  bf16
        "w2_t":   stack_w("w2"),     # (L, Dff, D)  bf16
        "vecs":   vecs,              # (L, 8, 128)  f32
        "fcw_t": jnp.pad(params["fc_w"].T,
                         ((0, 0), (0, V_PAD - N_TOKEN))).astype(jnp.bfloat16),   # (D, 128)
        "fcb":   jnp.pad(params["fc_b"], ((0, 0), (0, V_PAD - N_TOKEN))),        # (1, 128)
    }


def cadenza_forward(token_ids, params=None, prep=None):
    if prep is None:
        prep = prepare_params(params)
    # TODO(synk): config.attn_mask defaults to the Python value `False` (ill-typed for
    #             nn.TransformerEncoder); implemented as the unmasked path.
    return run_fused_forward(token_ids, prep)


if __name__ == "__main__":
    key = jax.random.PRNGKey(0)
    pkey, xkey = jax.random.split(key)
    params = init_params(pkey)
    prep = prepare_params(params)

    B, S = 2, 8
    token_ids = jax.random.randint(xkey, (B, S), 0, N_TOKEN, dtype=jnp.int32)

    fwd = jax.jit(lambda ids, p: cadenza_forward(ids, prep=p))
    out = fwd(token_ids, prep)
    out = jax.block_until_ready(out)
    assert out.shape == (B, S, N_TOKEN), out.shape
    assert bool(jnp.all(jnp.isfinite(out)))
    print("KERNEL_OK")
</pallas_src>

<mosaic_0001>
module attributes {stable_mosaic.version = 11 : i64} {
  func.func @fused_forward_kernel(%arg0: i32, %arg1: memref<8x1xi32, #tpu.memory_space<vmem>>, %arg2: memref<8x32xf32, #tpu.memory_space<vmem>>, %arg3: memref<64x32xf32, #tpu.memory_space<vmem>>, %arg4: memref<2x32x96xbf16, #tpu.memory_space<vmem>>, %arg5: memref<2x32x32xbf16, #tpu.memory_space<vmem>>, %arg6: memref<2x32x64xbf16, #tpu.memory_space<vmem>>, %arg7: memref<2x64x32xbf16, #tpu.memory_space<vmem>>, %arg8: memref<2x8x128xf32, #tpu.memory_space<vmem>>, %arg9: memref<32x128xbf16, #tpu.memory_space<vmem>>, %arg10: memref<1x128xf32, #tpu.memory_space<vmem>>, %arg11: memref<8x128xf32, #tpu.memory_space<vmem>>) attributes {dimension_semantics = [#tpu.dimension_semantics<parallel>], iteration_bounds = array<i64: 2>, scalar_prefetch = 0 : i64, scratch_operands = 0 : i64, tpu.core_type = #tpu.core_type<tc>, window_params = [{transform_indices = @transform_0, window_bounds = array<i64: 8, 1>}, {transform_indices = @transform_1, window_bounds = array<i64: 8, 32>}, {pipeline_mode = #tpu.pipeline_mode<synchronous>, transform_indices = @transform_2, window_bounds = array<i64: 64, 32>}, {pipeline_mode = #tpu.pipeline_mode<synchronous>, transform_indices = @transform_3, window_bounds = array<i64: 2, 32, 96>}, {pipeline_mode = #tpu.pipeline_mode<synchronous>, transform_indices = @transform_4, window_bounds = array<i64: 2, 32, 32>}, {pipeline_mode = #tpu.pipeline_mode<synchronous>, transform_indices = @transform_5, window_bounds = array<i64: 2, 32, 64>}, {pipeline_mode = #tpu.pipeline_mode<synchronous>, transform_indices = @transform_6, window_bounds = array<i64: 2, 64, 32>}, {pipeline_mode = #tpu.pipeline_mode<synchronous>, transform_indices = @transform_7, window_bounds = array<i64: 2, 8, 128>}, {pipeline_mode = #tpu.pipeline_mode<synchronous>, transform_indices = @transform_8, window_bounds = array<i64: 32, 128>}, {pipeline_mode = #tpu.pipeline_mode<synchronous>, transform_indices = @transform_9, window_bounds = array<i64: 1, 128>}, {transform_indices = @transform_10, window_bounds = array<i64: 8, 128>}]} {
    %c0 = arith.constant 0 : index
    %c0_0 = arith.constant 0 : index
    %0 = vector.load %arg1[%c0, %c0_0] : memref<8x1xi32, #tpu.memory_space<vmem>>, vector<8x1xi32>
    %1 = tpu.iota {dimensions = array<i32: 1>} : vector<8x64xi32>
    %2 = vector.broadcast %0 : vector<8x1xi32> to vector<8x64xi32>
    %3 = arith.cmpi eq, %1, %2 : vector<8x64xi32>
    %cst = arith.constant 1.000000e+00 : f32
    %cst_1 = arith.constant 0.000000e+00 : f32
    %4 = vector.broadcast %cst : f32 to vector<8x64xf32>
    %5 = vector.broadcast %cst_1 : f32 to vector<8x64xf32>
    %6 = arith.select %3, %4, %5 : vector<8x64xi1>, vector<8x64xf32>
    %c0_2 = arith.constant 0 : index
    %c0_3 = arith.constant 0 : index
    %7 = vector.load %arg3[%c0_2, %c0_3] : memref<64x32xf32, #tpu.memory_space<vmem>>, vector<64x32xf32>
    %cst_4 = arith.constant dense<0.000000e+00> : vector<8x32xf32>
    %8 = tpu.matmul %6, %7, %cst_4 {dimension_numbers = #tpu.dot_dimension_numbers<[1], [0], [0], [1], [0, 0, 1, 1], [], []>} : vector<8x64xf32>, vector<64x32xf32>, vector<8x32xf32> -> vector<8x32xf32>
    %c0_5 = arith.constant 0 : index
    %c0_6 = arith.constant 0 : index
    %9 = vector.load %arg2[%c0_5, %c0_6] : memref<8x32xf32, #tpu.memory_space<vmem>>, vector<8x32xf32>
    %10 = arith.addf %8, %9 : vector<8x32xf32>
    %c0_7 = arith.constant 0 : index
    %c0_8 = arith.constant 0 : index
    %c0_9 = arith.constant 0 : index
    %11 = vector.load %arg8[%c0_7, %c0_8, %c0_9] : memref<2x8x128xf32, #tpu.memory_space<vmem>>, vector<1x8x128xf32>
    %12 = vector.shape_cast %11 : vector<1x8x128xf32> to vector<8x128xf32>
    %13 = vector.extract_strided_slice %12 {offsets = [0, 0], sizes = [1, 96], strides = [1, 1]} : vector<8x128xf32> to vector<1x96xf32>
    %14 = vector.extract_strided_slice %12 {offsets = [1, 0], sizes = [1, 32], strides = [1, 1]} : vector<8x128xf32> to vector<1x32xf32>
    %15 = vector.extract_strided_slice %12 {offsets = [2, 0], sizes = [1, 64], strides = [1, 1]} : vector<8x128xf32> to vector<1x64xf32>
    %16 = vector.extract_strided_slice %12 {offsets = [3, 0], sizes = [1, 32], strides = [1, 1]} : vector<8x128xf32> to vector<1x32xf32>
    %17 = vector.extract_strided_slice %12 {offsets = [4, 0], sizes = [1, 32], strides = [1, 1]} : vector<8x128xf32> to vector<1x32xf32>
    %18 = vector.extract_strided_slice %12 {offsets = [5, 0], sizes = [1, 32], strides = [1, 1]} : vector<8x128xf32> to vector<1x32xf32>
    %19 = vector.extract_strided_slice %12 {offsets = [6, 0], sizes = [1, 32], strides = [1, 1]} : vector<8x128xf32> to vector<1x32xf32>
    %20 = vector.extract_strided_slice %12 {offsets = [7, 0], sizes = [1, 32], strides = [1, 1]} : vector<8x128xf32> to vector<1x32xf32>
    %21 = arith.truncf %10 : vector<8x32xf32> to vector<8x32xbf16>
    %c0_10 = arith.constant 0 : index
    %c0_11 = arith.constant 0 : index
    %c0_12 = arith.constant 0 : index
    %22 = vector.load %arg4[%c0_10, %c0_11, %c0_12] : memref<2x32x96xbf16, #tpu.memory_space<vmem>>, vector<1x32x96xbf16>
    %23 = vector.shape_cast %22 : vector<1x32x96xbf16> to vector<32x96xbf16>
    %cst_13 = arith.constant dense<0.000000e+00> : vector<8x96xf32>
    %24 = tpu.matmul %21, %23, %cst_13 {dimension_numbers = #tpu.dot_dimension_numbers<[1], [0], [0], [1], [0, 0, 1, 1], [], []>} : vector<8x32xbf16>, vector<32x96xbf16>, vector<8x96xf32> -> vector<8x96xf32>
    %25 = vector.broadcast %13 : vector<1x96xf32> to vector<8x96xf32>
    %26 = arith.addf %24, %25 : vector<8x96xf32>
    %27 = vector.extract_strided_slice %26 {offsets = [0, 0], sizes = [8, 32], strides = [1, 1]} : vector<8x96xf32> to vector<8x32xf32>
    %28 = vector.shape_cast %27 : vector<8x32xf32> to vector<1x8x32xf32>
    %29 = vector.extract_strided_slice %26 {offsets = [0, 32], sizes = [8, 32], strides = [1, 1]} : vector<8x96xf32> to vector<8x32xf32>
    %30 = vector.shape_cast %29 : vector<8x32xf32> to vector<1x8x32xf32>
    %31 = vector.extract_strided_slice %26 {offsets = [0, 64], sizes = [8, 32], strides = [1, 1]} : vector<8x96xf32> to vector<8x32xf32>
    %32 = vector.shape_cast %31 : vector<8x32xf32> to vector<1x8x32xf32>
    %33 = vector.extract_strided_slice %28 {offsets = [0, 0, 0], sizes = [1, 8, 8], strides = [1, 1, 1]} : vector<1x8x32xf32> to vector<1x8x8xf32>
    %cst_14 = arith.constant 0.353553385 : f32
    %34 = vector.broadcast %cst_14 : f32 to vector<1x8x8xf32>
    %35 = arith.mulf %33, %34 : vector<1x8x8xf32>
    %36 = arith.truncf %35 : vector<1x8x8xf32> to vector<1x8x8xbf16>
    %37 = vector.extract_strided_slice %30 {offsets = [0, 0, 0], sizes = [1, 8, 8], strides = [1, 1, 1]} : vector<1x8x32xf32> to vector<1x8x8xf32>
    %38 = arith.truncf %37 : vector<1x8x8xf32> to vector<1x8x8xbf16>
    %39 = vector.extract_strided_slice %32 {offsets = [0, 0, 0], sizes = [1, 8, 8], strides = [1, 1, 1]} : vector<1x8x32xf32> to vector<1x8x8xf32>
    %40 = arith.truncf %39 : vector<1x8x8xf32> to vector<1x8x8xbf16>
    "tpu.trace_start"() <{level = 10 : i32, message = "bqd,bkd->bqk"}> : () -> ()
    %cst_15 = arith.constant dense<0.000000e+00> : vector<1x8x8xf32>
    %41 = tpu.matmul %36, %38, %cst_15 {dimension_numbers = #tpu.dot_dimension_numbers<[2], [2], [1], [1], [0, 0, 0, 1, 1, 1], [0], [0]>} : vector<1x8x8xbf16>, vector<1x8x8xbf16>, vector<1x8x8xf32> -> vector<1x8x8xf32>
    "tpu.trace_stop"() : () -> ()
    %cst_16 = arith.constant dense<0xFF800000> : vector<1x8xf32>
    %42 = vector.multi_reduction <maximumf>, %41, %cst_16 [2] : vector<1x8x8xf32> to vector<1x8xf32>
    %43 = vector.shape_cast %42 : vector<1x8xf32> to vector<1x8x1xf32>
    %44 = vector.broadcast %43 : vector<1x8x1xf32> to vector<1x8x8xf32>
    %45 = arith.subf %41, %44 : vector<1x8x8xf32>
    %46 = math.exp %45 : vector<1x8x8xf32>
    %cst_17 = arith.constant dense<0.000000e+00> : vector<1x8xf32>
    %47 = vector.multi_reduction <add>, %46, %cst_17 [2] : vector<1x8x8xf32> to vector<1x8xf32>
    %48 = vector.shape_cast %47 : vector<1x8xf32> to vector<1x8x1xf32>
    %49 = tpu.reciprocal %48 {approx = true} : vector<1x8x1xf32> -> vector<1x8x1xf32>
    %50 = vector.broadcast %49 : vector<1x8x1xf32> to vector<1x8x8xf32>
    %51 = arith.mulf %46, %50 : vector<1x8x8xf32>
    %52 = arith.truncf %51 : vector<1x8x8xf32> to vector<1x8x8xbf16>
    "tpu.trace_start"() <{level = 10 : i32, message = "bqk,bkd->bqd"}> : () -> ()
    %cst_18 = arith.constant dense<0.000000e+00> : vector<1x8x8xf32>
    %53 = tpu.matmul %52, %40, %cst_18 {dimension_numbers = #tpu.dot_dimension_numbers<[2], [1], [1], [2], [0, 0, 0, 1, 1, 2], [0], [0]>} : vector<1x8x8xbf16>, vector<1x8x8xbf16>, vector<1x8x8xf32> -> vector<1x8x8xf32>
    "tpu.trace_stop"() : () -> ()
    %54 = vector.extract_strided_slice %28 {offsets = [0, 0, 8], sizes = [1, 8, 8], strides = [1, 1, 1]} : vector<1x8x32xf32> to vector<1x8x8xf32>
    %cst_19 = arith.constant 0.353553385 : f32
    %55 = vector.broadcast %cst_19 : f32 to vector<1x8x8xf32>
    %56 = arith.mulf %54, %55 : vector<1x8x8xf32>
    %57 = arith.truncf %56 : vector<1x8x8xf32> to vector<1x8x8xbf16>
    %58 = vector.extract_strided_slice %30 {offsets = [0, 0, 8], sizes = [1, 8, 8], strides = [1, 1, 1]} : vector<1x8x32xf32> to vector<1x8x8xf32>
    %59 = arith.truncf %58 : vector<1x8x8xf32> to vector<1x8x8xbf16>
    %60 = vector.extract_strided_slice %32 {offsets = [0, 0, 8], sizes = [1, 8, 8], strides = [1, 1, 1]} : vector<1x8x32xf32> to vector<1x8x8xf32>
    %61 = arith.truncf %60 : vector<1x8x8xf32> to vector<1x8x8xbf16>
    "tpu.trace_start"() <{level = 10 : i32, message = "bqd,bkd->bqk"}> : () -> ()
    %cst_20 = arith.constant dense<0.000000e+00> : vector<1x8x8xf32>
    %62 = tpu.matmul %57, %59, %cst_20 {dimension_numbers = #tpu.dot_dimension_numbers<[2], [2], [1], [1], [0, 0, 0, 1, 1, 1], [0], [0]>} : vector<1x8x8xbf16>, vector<1x8x8xbf16>, vector<1x8x8xf32> -> vector<1x8x8xf32>
    "tpu.trace_stop"() : () -> ()
    %cst_21 = arith.constant dense<0xFF800000> : vector<1x8xf32>
    %63 = vector.multi_reduction <maximumf>, %62, %cst_21 [2] : vector<1x8x8xf32> to vector<1x8xf32>
    %64 = vector.shape_cast %63 : vector<1x8xf32> to vector<1x8x1xf32>
    %65 = vector.broadcast %64 : vector<1x8x1xf32> to vector<1x8x8xf32>
    %66 = arith.subf %62, %65 : vector<1x8x8xf32>
    %67 = math.exp %66 : vector<1x8x8xf32>
    %cst_22 = arith.constant dense<0.000000e+00> : vector<1x8xf32>
    %68 = vector.multi_reduction <add>, %67, %cst_22 [2] : vector<1x8x8xf32> to vector<1x8xf32>
    %69 = vector.shape_cast %68 : vector<1x8xf32> to vector<1x8x1xf32>
    %70 = tpu.reciprocal %69 {approx = true} : vector<1x8x1xf32> -> vector<1x8x1xf32>
    %71 = vector.broadcast %70 : vector<1x8x1xf32> to vector<1x8x8xf32>
    %72 = arith.mulf %67, %71 : vector<1x8x8xf32>
    %73 = arith.truncf %72 : vector<1x8x8xf32> to vector<1x8x8xbf16>
    "tpu.trace_start"() <{level = 10 : i32, message = "bqk,bkd->bqd"}> : () -> ()
    %cst_23 = arith.constant dense<0.000000e+00> : vector<1x8x8xf32>
    %74 = tpu.matmul %73, %61, %cst_23 {dimension_numbers = #tpu.dot_dimension_numbers<[2], [1], [1], [2], [0, 0, 0, 1, 1, 2], [0], [0]>} : vector<1x8x8xbf16>, vector<1x8x8xbf16>, vector<1x8x8xf32> -> vector<1x8x8xf32>
    "tpu.trace_stop"() : () -> ()
    %75 = vector.extract_strided_slice %28 {offsets = [0, 0, 16], sizes = [1, 8, 8], strides = [1, 1, 1]} : vector<1x8x32xf32> to vector<1x8x8xf32>
    %cst_24 = arith.constant 0.353553385 : f32
    %76 = vector.broadcast %cst_24 : f32 to vector<1x8x8xf32>
    %77 = arith.mulf %75, %76 : vector<1x8x8xf32>
    %78 = arith.truncf %77 : vector<1x8x8xf32> to vector<1x8x8xbf16>
    %79 = vector.extract_strided_slice %30 {offsets = [0, 0, 16], sizes = [1, 8, 8], strides = [1, 1, 1]} : vector<1x8x32xf32> to vector<1x8x8xf32>
    %80 = arith.truncf %79 : vector<1x8x8xf32> to vector<1x8x8xbf16>
    %81 = vector.extract_strided_slice %32 {offsets = [0, 0, 16], sizes = [1, 8, 8], strides = [1, 1, 1]} : vector<1x8x32xf32> to vector<1x8x8xf32>
    %82 = arith.truncf %81 : vector<1x8x8xf32> to vector<1x8x8xbf16>
    "tpu.trace_start"() <{level = 10 : i32, message = "bqd,bkd->bqk"}> : () -> ()
    %cst_25 = arith.constant dense<0.000000e+00> : vector<1x8x8xf32>
    %83 = tpu.matmul %78, %80, %cst_25 {dimension_numbers = #tpu.dot_dimension_numbers<[2], [2], [1], [1], [0, 0, 0, 1, 1, 1], [0], [0]>} : vector<1x8x8xbf16>, vector<1x8x8xbf16>, vector<1x8x8xf32> -> vector<1x8x8xf32>
    "tpu.trace_stop"() : () -> ()
    %cst_26 = arith.constant dense<0xFF800000> : vector<1x8xf32>
    %84 = vector.multi_reduction <maximumf>, %83, %cst_26 [2] : vector<1x8x8xf32> to vector<1x8xf32>
    %85 = vector.shape_cast %84 : vector<1x8xf32> to vector<1x8x1xf32>
    %86 = vector.broadcast %85 : vector<1x8x1xf32> to vector<1x8x8xf32>
    %87 = arith.subf %83, %86 : vector<1x8x8xf32>
    %88 = math.exp %87 : vector<1x8x8xf32>
    %cst_27 = arith.constant dense<0.000000e+00> : vector<1x8xf32>
    %89 = vector.multi_reduction <add>, %88, %cst_27 [2] : vector<1x8x8xf32> to vector<1x8xf32>
    %90 = vector.shape_cast %89 : vector<1x8xf32> to vector<1x8x1xf32>
    %91 = tpu.reciprocal %90 {approx = true} : vector<1x8x1xf32> -> vector<1x8x1xf32>
    %92 = vector.broadcast %91 : vector<1x8x1xf32> to vector<1x8x8xf32>
    %93 = arith.mulf %88, %92 : vector<1x8x8xf32>
    %94 = arith.truncf %93 : vector<1x8x8xf32> to vector<1x8x8xbf16>
    "tpu.trace_start"() <{level = 10 : i32, message = "bqk,bkd->bqd"}> : () -> ()
    %cst_28 = arith.constant dense<0.000000e+00> : vector<1x8x8xf32>
    %95 = tpu.matmul %94, %82, %cst_28 {dimension_numbers = #tpu.dot_dimension_numbers<[2], [1], [1], [2], [0, 0, 0, 1, 1, 2], [0], [0]>} : vector<1x8x8xbf16>, vector<1x8x8xbf16>, vector<1x8x8xf32> -> vector<1x8x8xf32>
    "tpu.trace_stop"() : () -> ()
    %96 = vector.extract_strided_slice %28 {offsets = [0, 0, 24], sizes = [1, 8, 8], strides = [1, 1, 1]} : vector<1x8x32xf32> to vector<1x8x8xf32>
    %cst_29 = arith.constant 0.353553385 : f32
    %97 = vector.broadcast %cst_29 : f32 to vector<1x8x8xf32>
    %98 = arith.mulf %96, %97 : vector<1x8x8xf32>
    %99 = arith.truncf %98 : vector<1x8x8xf32> to vector<1x8x8xbf16>
    %100 = vector.extract_strided_slice %30 {offsets = [0, 0, 24], sizes = [1, 8, 8], strides = [1, 1, 1]} : vector<1x8x32xf32> to vector<1x8x8xf32>
    %101 = arith.truncf %100 : vector<1x8x8xf32> to vector<1x8x8xbf16>
    %102 = vector.extract_strided_slice %32 {offsets = [0, 0, 24], sizes = [1, 8, 8], strides = [1, 1, 1]} : vector<1x8x32xf32> to vector<1x8x8xf32>
    %103 = arith.truncf %102 : vector<1x8x8xf32> to vector<1x8x8xbf16>
    "tpu.trace_start"() <{level = 10 : i32, message = "bqd,bkd->bqk"}> : () -> ()
    %cst_30 = arith.constant dense<0.000000e+00> : vector<1x8x8xf32>
    %104 = tpu.matmul %99, %101, %cst_30 {dimension_numbers = #tpu.dot_dimension_numbers<[2], [2], [1], [1], [0, 0, 0, 1, 1, 1], [0], [0]>} : vector<1x8x8xbf16>, vector<1x8x8xbf16>, vector<1x8x8xf32> -> vector<1x8x8xf32>
    "tpu.trace_stop"() : () -> ()
    %cst_31 = arith.constant dense<0xFF800000> : vector<1x8xf32>
    %105 = vector.multi_reduction <maximumf>, %104, %cst_31 [2] : vector<1x8x8xf32> to vector<1x8xf32>
    %106 = vector.shape_cast %105 : vector<1x8xf32> to vector<1x8x1xf32>
    %107 = vector.broadcast %106 : vector<1x8x1xf32> to vector<1x8x8xf32>
    %108 = arith.subf %104, %107 : vector<1x8x8xf32>
    %109 = math.exp %108 : vector<1x8x8xf32>
    %cst_32 = arith.constant dense<0.000000e+00> : vector<1x8xf32>
    %110 = vector.multi_reduction <add>, %109, %cst_32 [2] : vector<1x8x8xf32> to vector<1x8xf32>
    %111 = vector.shape_cast %110 : vector<1x8xf32> to vector<1x8x1xf32>
    %112 = tpu.reciprocal %111 {approx = true} : vector<1x8x1xf32> -> vector<1x8x1xf32>
    %113 = vector.broadcast %112 : vector<1x8x1xf32> to vector<1x8x8xf32>
    %114 = arith.mulf %109, %113 : vector<1x8x8xf32>
    %115 = arith.truncf %114 : vector<1x8x8xf32> to vector<1x8x8xbf16>
    "tpu.trace_start"() <{level = 10 : i32, message = "bqk,bkd->bqd"}> : () -> ()
    %cst_33 = arith.constant dense<0.000000e+00> : vector<1x8x8xf32>
    %116 = tpu.matmul %115, %103, %cst_33 {dimension_numbers = #tpu.dot_dimension_numbers<[2], [1], [1], [2], [0, 0, 0, 1, 1, 2], [0], [0]>} : vector<1x8x8xbf16>, vector<1x8x8xbf16>, vector<1x8x8xf32> -> vector<1x8x8xf32>
    "tpu.trace_stop"() : () -> ()
    %117 = tpu.concatenate %53, %74, %95, %116 in 2 : vector<1x8x8xf32>, vector<1x8x8xf32>, vector<1x8x8xf32>, vector<1x8x8xf32> -> vector<1x8x32xf32>
    %118 = vector.shape_cast %117 : vector<1x8x32xf32> to vector<8x32xf32>
    %119 = arith.truncf %118 : vector<8x32xf32> to vector<8x32xbf16>
    %c0_34 = arith.constant 0 : index
    %c0_35 = arith.constant 0 : index
    %c0_36 = arith.constant 0 : index
    %120 = vector.load %arg5[%c0_34, %c0_35, %c0_36] : memref<2x32x32xbf16, #tpu.memory_space<vmem>>, vector<1x32x32xbf16>
    %121 = vector.shape_cast %120 : vector<1x32x32xbf16> to vector<32x32xbf16>
    %cst_37 = arith.constant dense<0.000000e+00> : vector<8x32xf32>
    %122 = tpu.matmul %119, %121, %cst_37 {dimension_numbers = #tpu.dot_dimension_numbers<[1], [0], [0], [1], [0, 0, 1, 1], [], []>} : vector<8x32xbf16>, vector<32x32xbf16>, vector<8x32xf32> -> vector<8x32xf32>
    %123 = vector.broadcast %14 : vector<1x32xf32> to vector<8x32xf32>
    %124 = arith.addf %122, %123 : vector<8x32xf32>
    %125 = arith.addf %10, %124 : vector<8x32xf32>
    %cst_38 = arith.constant dense<0.000000e+00> : vector<8xf32>
    %126 = vector.multi_reduction <add>, %125, %cst_38 [1] : vector<8x32xf32> to vector<8xf32>
    %127 = vector.shape_cast %126 : vector<8xf32> to vector<8x1xf32>
    %cst_39 = arith.constant 3.200000e+01 : f32
    %128 = vector.broadcast %cst_39 : f32 to vector<8x1xf32>
    %129 = arith.divf %127, %128 : vector<8x1xf32>
    %130 = vector.broadcast %129 : vector<8x1xf32> to vector<8x32xf32>
    %131 = arith.subf %125, %130 : vector<8x32xf32>
    %132 = arith.mulf %131, %131 : vector<8x32xf32>
    %cst_40 = arith.constant dense<0.000000e+00> : vector<8xf32>
    %133 = vector.multi_reduction <add>, %132, %cst_40 [1] : vector<8x32xf32> to vector<8xf32>
    %134 = vector.shape_cast %133 : vector<8xf32> to vector<8x1xf32>
    %cst_41 = arith.constant 3.200000e+01 : f32
    %135 = vector.broadcast %cst_41 : f32 to vector<8x1xf32>
    %136 = arith.divf %134, %135 : vector<8x1xf32>
    %137 = vector.broadcast %129 : vector<8x1xf32> to vector<8x32xf32>
    %138 = arith.subf %125, %137 : vector<8x32xf32>
    %cst_42 = arith.constant 9.99999974E-6 : f32
    %139 = vector.broadcast %cst_42 : f32 to vector<8x1xf32>
    %140 = arith.addf %136, %139 : vector<8x1xf32>
    %141 = math.rsqrt %140 : vector<8x1xf32>
    %142 = vector.broadcast %141 : vector<8x1xf32> to vector<8x32xf32>
    %143 = arith.mulf %138, %142 : vector<8x32xf32>
    %144 = vector.broadcast %17 : vector<1x32xf32> to vector<8x32xf32>
    %145 = arith.mulf %143, %144 : vector<8x32xf32>
    %146 = vector.broadcast %18 : vector<1x32xf32> to vector<8x32xf32>
    %147 = arith.addf %145, %146 : vector<8x32xf32>
    %148 = arith.truncf %147 : vector<8x32xf32> to vector<8x32xbf16>
    %c0_43 = arith.constant 0 : index
    %c0_44 = arith.constant 0 : index
    %c0_45 = arith.constant 0 : index
    %149 = vector.load %arg6[%c0_43, %c0_44, %c0_45] : memref<2x32x64xbf16, #tpu.memory_space<vmem>>, vector<1x32x64xbf16>
    %150 = vector.shape_cast %149 : vector<1x32x64xbf16> to vector<32x64xbf16>
    %cst_46 = arith.constant dense<0.000000e+00> : vector<8x64xf32>
    %151 = tpu.matmul %148, %150, %cst_46 {dimension_numbers = #tpu.dot_dimension_numbers<[1], [0], [0], [1], [0, 0, 1, 1], [], []>} : vector<8x32xbf16>, vector<32x64xbf16>, vector<8x64xf32> -> vector<8x64xf32>
    %152 = vector.broadcast %15 : vector<1x64xf32> to vector<8x64xf32>
    %153 = arith.addf %151, %152 : vector<8x64xf32>
    %cst_47 = arith.constant 0.000000e+00 : f32
    %154 = vector.broadcast %cst_47 : f32 to vector<8x64xf32>
    %155 = arith.maximumf %153, %154 : vector<8x64xf32>
    %156 = arith.truncf %155 : vector<8x64xf32> to vector<8x64xbf16>
    %c0_48 = arith.constant 0 : index
    %c0_49 = arith.constant 0 : index
    %c0_50 = arith.constant 0 : index
    %157 = vector.load %arg7[%c0_48, %c0_49, %c0_50] : memref<2x64x32xbf16, #tpu.memory_space<vmem>>, vector<1x64x32xbf16>
    %158 = vector.shape_cast %157 : vector<1x64x32xbf16> to vector<64x32xbf16>
    %cst_51 = arith.constant dense<0.000000e+00> : vector<8x32xf32>
    %159 = tpu.matmul %156, %158, %cst_51 {dimension_numbers = #tpu.dot_dimension_numbers<[1], [0], [0], [1], [0, 0, 1, 1], [], []>} : vector<8x64xbf16>, vector<64x32xbf16>, vector<8x32xf32> -> vector<8x32xf32>
    %160 = vector.broadcast %16 : vector<1x32xf32> to vector<8x32xf32>
    %161 = arith.addf %159, %160 : vector<8x32xf32>
    %162 = arith.addf %147, %161 : vector<8x32xf32>
    %cst_52 = arith.constant dense<0.000000e+00> : vector<8xf32>
    %163 = vector.multi_reduction <add>, %162, %cst_52 [1] : vector<8x32xf32> to vector<8xf32>
    %164 = vector.shape_cast %163 : vector<8xf32> to vector<8x1xf32>
    %cst_53 = arith.constant 3.200000e+01 : f32
    %165 = vector.broadcast %cst_53 : f32 to vector<8x1xf32>
    %166 = arith.divf %164, %165 : vector<8x1xf32>
    %167 = vector.broadcast %166 : vector<8x1xf32> to vector<8x32xf32>
    %168 = arith.subf %162, %167 : vector<8x32xf32>
    %169 = arith.mulf %168, %168 : vector<8x32xf32>
    %cst_54 = arith.constant dense<0.000000e+00> : vector<8xf32>
    %170 = vector.multi_reduction <add>, %169, %cst_54 [1] : vector<8x32xf32> to vector<8xf32>
    %171 = vector.shape_cast %170 : vector<8xf32> to vector<8x1xf32>
    %cst_55 = arith.constant 3.200000e+01 : f32
    %172 = vector.broadcast %cst_55 : f32 to vector<8x1xf32>
    %173 = arith.divf %171, %172 : vector<8x1xf32>
    %174 = vector.broadcast %166 : vector<8x1xf32> to vector<8x32xf32>
    %175 = arith.subf %162, %174 : vector<8x32xf32>
    %cst_56 = arith.constant 9.99999974E-6 : f32
    %176 = vector.broadcast %cst_56 : f32 to vector<8x1xf32>
    %177 = arith.addf %173, %176 : vector<8x1xf32>
    %178 = math.rsqrt %177 : vector<8x1xf32>
    %179 = vector.broadcast %178 : vector<8x1xf32> to vector<8x32xf32>
    %180 = arith.mulf %175, %179 : vector<8x32xf32>
    %181 = vector.broadcast %19 : vector<1x32xf32> to vector<8x32xf32>
    %182 = arith.mulf %180, %181 : vector<8x32xf32>
    %183 = vector.broadcast %20 : vector<1x32xf32> to vector<8x32xf32>
    %184 = arith.addf %182, %183 : vector<8x32xf32>
    %c1 = arith.constant 1 : index
    %c0_57 = arith.constant 0 : index
    %c0_58 = arith.constant 0 : index
    %185 = vector.load %arg8[%c1, %c0_57, %c0_58] : memref<2x8x128xf32, #tpu.memory_space<vmem>>, vector<1x8x128xf32>
    %186 = vector.shape_cast %185 : vector<1x8x128xf32> to vector<8x128xf32>
    %187 = vector.extract_strided_slice %186 {offsets = [0, 0], sizes = [1, 96], strides = [1, 1]} : vector<8x128xf32> to vector<1x96xf32>
    %188 = vector.extract_strided_slice %186 {offsets = [1, 0], sizes = [1, 32], strides = [1, 1]} : vector<8x128xf32> to vector<1x32xf32>
    %189 = vector.extract_strided_slice %186 {offsets = [2, 0], sizes = [1, 64], strides = [1, 1]} : vector<8x128xf32> to vector<1x64xf32>
    %190 = vector.extract_strided_slice %186 {offsets = [3, 0], sizes = [1, 32], strides = [1, 1]} : vector<8x128xf32> to vector<1x32xf32>
    %191 = vector.extract_strided_slice %186 {offsets = [4, 0], sizes = [1, 32], strides = [1, 1]} : vector<8x128xf32> to vector<1x32xf32>
    %192 = vector.extract_strided_slice %186 {offsets = [5, 0], sizes = [1, 32], strides = [1, 1]} : vector<8x128xf32> to vector<1x32xf32>
    %193 = vector.extract_strided_slice %186 {offsets = [6, 0], sizes = [1, 32], strides = [1, 1]} : vector<8x128xf32> to vector<1x32xf32>
    %194 = vector.extract_strided_slice %186 {offsets = [7, 0], sizes = [1, 32], strides = [1, 1]} : vector<8x128xf32> to vector<1x32xf32>
    %195 = arith.truncf %184 : vector<8x32xf32> to vector<8x32xbf16>
    %c1_59 = arith.constant 1 : index
    %c0_60 = arith.constant 0 : index
    %c0_61 = arith.constant 0 : index
    %196 = vector.load %arg4[%c1_59, %c0_60, %c0_61] : memref<2x32x96xbf16, #tpu.memory_space<vmem>>, vector<1x32x96xbf16>
    %197 = vector.shape_cast %196 : vector<1x32x96xbf16> to vector<32x96xbf16>
    %cst_62 = arith.constant dense<0.000000e+00> : vector<8x96xf32>
    %198 = tpu.matmul %195, %197, %cst_62 {dimension_numbers = #tpu.dot_dimension_numbers<[1], [0], [0], [1], [0, 0, 1, 1], [], []>} : vector<8x32xbf16>, vector<32x96xbf16>, vector<8x96xf32> -> vector<8x96xf32>
    %199 = vector.broadcast %187 : vector<1x96xf32> to vector<8x96xf32>
    %200 = arith.addf %198, %199 : vector<8x96xf32>
    %201 = vector.extract_strided_slice %200 {offsets = [0, 0], sizes = [8, 32], strides = [1, 1]} : vector<8x96xf32> to vector<8x32xf32>
    %202 = vector.shape_cast %201 : vector<8x32xf32> to vector<1x8x32xf32>
    %203 = vector.extract_strided_slice %200 {offsets = [0, 32], sizes = [8, 32], strides = [1, 1]} : vector<8x96xf32> to vector<8x32xf32>
    %204 = vector.shape_cast %203 : vector<8x32xf32> to vector<1x8x32xf32>
    %205 = vector.extract_strided_slice %200 {offsets = [0, 64], sizes = [8, 32], strides = [1, 1]} : vector<8x96xf32> to vector<8x32xf32>
    %206 = vector.shape_cast %205 : vector<8x32xf32> to vector<1x8x32xf32>
    %207 = vector.extract_strided_slice %202 {offsets = [0, 0, 0], sizes = [1, 8, 8], strides = [1, 1, 1]} : vector<1x8x32xf32> to vector<1x8x8xf32>
    %cst_63 = arith.constant 0.353553385 : f32
    %208 = vector.broadcast %cst_63 : f32 to vector<1x8x8xf32>
    %209 = arith.mulf %207, %208 : vector<1x8x8xf32>
    %210 = arith.truncf %209 : vector<1x8x8xf32> to vector<1x8x8xbf16>
    %211 = vector.extract_strided_slice %204 {offsets = [0, 0, 0], sizes = [1, 8, 8], strides = [1, 1, 1]} : vector<1x8x32xf32> to vector<1x8x8xf32>
    %212 = arith.truncf %211 : vector<1x8x8xf32> to vector<1x8x8xbf16>
    %213 = vector.extract_strided_slice %206 {offsets = [0, 0, 0], sizes = [1, 8, 8], strides = [1, 1, 1]} : vector<1x8x32xf32> to vector<1x8x8xf32>
    %214 = arith.truncf %213 : vector<1x8x8xf32> to vector<1x8x8xbf16>
    "tpu.trace_start"() <{level = 10 : i32, message = "bqd,bkd->bqk"}> : () -> ()
    %cst_64 = arith.constant dense<0.000000e+00> : vector<1x8x8xf32>
    %215 = tpu.matmul %210, %212, %cst_64 {dimension_numbers = #tpu.dot_dimension_numbers<[2], [2], [1], [1], [0, 0, 0, 1, 1, 1], [0], [0]>} : vector<1x8x8xbf16>, vector<1x8x8xbf16>, vector<1x8x8xf32> -> vector<1x8x8xf32>
    "tpu.trace_stop"() : () -> ()
    %cst_65 = arith.constant dense<0xFF800000> : vector<1x8xf32>
    %216 = vector.multi_reduction <maximumf>, %215, %cst_65 [2] : vector<1x8x8xf32> to vector<1x8xf32>
    %217 = vector.shape_cast %216 : vector<1x8xf32> to vector<1x8x1xf32>
    %218 = vector.broadcast %217 : vector<1x8x1xf32> to vector<1x8x8xf32>
    %219 = arith.subf %215, %218 : vector<1x8x8xf32>
    %220 = math.exp %219 : vector<1x8x8xf32>
    %cst_66 = arith.constant dense<0.000000e+00> : vector<1x8xf32>
    %221 = vector.multi_reduction <add>, %220, %cst_66 [2] : vector<1x8x8xf32> to vector<1x8xf32>
    %222 = vector.shape_cast %221 : vector<1x8xf32> to vector<1x8x1xf32>
    %223 = tpu.reciprocal %222 {approx = true} : vector<1x8x1xf32> -> vector<1x8x1xf32>
    %224 = vector.broadcast %223 : vector<1x8x1xf32> to vector<1x8x8xf32>
    %225 = arith.mulf %220, %224 : vector<1x8x8xf32>
    %226 = arith.truncf %225 : vector<1x8x8xf32> to vector<1x8x8xbf16>
    "tpu.trace_start"() <{level = 10 : i32, message = "bqk,bkd->bqd"}> : () -> ()
    %cst_67 = arith.constant dense<0.000000e+00> : vector<1x8x8xf32>
    %227 = tpu.matmul %226, %214, %cst_67 {dimension_numbers = #tpu.dot_dimension_numbers<[2], [1], [1], [2], [0, 0, 0, 1, 1, 2], [0], [0]>} : vector<1x8x8xbf16>, vector<1x8x8xbf16>, vector<1x8x8xf32> -> vector<1x8x8xf32>
    "tpu.trace_stop"() : () -> ()
    %228 = vector.extract_strided_slice %202 {offsets = [0, 0, 8], sizes = [1, 8, 8], strides = [1, 1, 1]} : vector<1x8x32xf32> to vector<1x8x8xf32>
    %cst_68 = arith.constant 0.353553385 : f32
    %229 = vector.broadcast %cst_68 : f32 to vector<1x8x8xf32>
    %230 = arith.mulf %228, %229 : vector<1x8x8xf32>
    %231 = arith.truncf %230 : vector<1x8x8xf32> to vector<1x8x8xbf16>
    %232 = vector.extract_strided_slice %204 {offsets = [0, 0, 8], sizes = [1, 8, 8], strides = [1, 1, 1]} : vector<1x8x32xf32> to vector<1x8x8xf32>
    %233 = arith.truncf %232 : vector<1x8x8xf32> to vector<1x8x8xbf16>
    %234 = vector.extract_strided_slice %206 {offsets = [0, 0, 8], sizes = [1, 8, 8], strides = [1, 1, 1]} : vector<1x8x32xf32> to vector<1x8x8xf32>
    %235 = arith.truncf %234 : vector<1x8x8xf32> to vector<1x8x8xbf16>
    "tpu.trace_start"() <{level = 10 : i32, message = "bqd,bkd->bqk"}> : () -> ()
    %cst_69 = arith.constant dense<0.000000e+00> : vector<1x8x8xf32>
    %236 = tpu.matmul %231, %233, %cst_69 {dimension_numbers = #tpu.dot_dimension_numbers<[2], [2], [1], [1], [0, 0, 0, 1, 1, 1], [0], [0]>} : vector<1x8x8xbf16>, vector<1x8x8xbf16>, vector<1x8x8xf32> -> vector<1x8x8xf32>
    "tpu.trace_stop"() : () -> ()
    %cst_70 = arith.constant dense<0xFF800000> : vector<1x8xf32>
    %237 = vector.multi_reduction <maximumf>, %236, %cst_70 [2] : vector<1x8x8xf32> to vector<1x8xf32>
    %238 = vector.shape_cast %237 : vector<1x8xf32> to vector<1x8x1xf32>
    %239 = vector.broadcast %238 : vector<1x8x1xf32> to vector<1x8x8xf32>
    %240 = arith.subf %236, %239 : vector<1x8x8xf32>
    %241 = math.exp %240 : vector<1x8x8xf32>
    %cst_71 = arith.constant dense<0.000000e+00> : vector<1x8xf32>
    %242 = vector.multi_reduction <add>, %241, %cst_71 [2] : vector<1x8x8xf32> to vector<1x8xf32>
    %243 = vector.shape_cast %242 : vector<1x8xf32> to vector<1x8x1xf32>
    %244 = tpu.reciprocal %243 {approx = true} : vector<1x8x1xf32> -> vector<1x8x1xf32>
    %245 = vector.broadcast %244 : vector<1x8x1xf32> to vector<1x8x8xf32>
    %246 = arith.mulf %241, %245 : vector<1x8x8xf32>
    %247 = arith.truncf %246 : vector<1x8x8xf32> to vector<1x8x8xbf16>
    "tpu.trace_start"() <{level = 10 : i32, message = "bqk,bkd->bqd"}> : () -> ()
    %cst_72 = arith.constant dense<0.000000e+00> : vector<1x8x8xf32>
    %248 = tpu.matmul %247, %235, %cst_72 {dimension_numbers = #tpu.dot_dimension_numbers<[2], [1], [1], [2], [0, 0, 0, 1, 1, 2], [0], [0]>} : vector<1x8x8xbf16>, vector<1x8x8xbf16>, vector<1x8x8xf32> -> vector<1x8x8xf32>
    "tpu.trace_stop"() : () -> ()
    %249 = vector.extract_strided_slice %202 {offsets = [0, 0, 16], sizes = [1, 8, 8], strides = [1, 1, 1]} : vector<1x8x32xf32> to vector<1x8x8xf32>
    %cst_73 = arith.constant 0.353553385 : f32
    %250 = vector.broadcast %cst_73 : f32 to vector<1x8x8xf32>
    %251 = arith.mulf %249, %250 : vector<1x8x8xf32>
    %252 = arith.truncf %251 : vector<1x8x8xf32> to vector<1x8x8xbf16>
    %253 = vector.extract_strided_slice %204 {offsets = [0, 0, 16], sizes = [1, 8, 8], strides = [1, 1, 1]} : vector<1x8x32xf32> to vector<1x8x8xf32>
    %254 = arith.truncf %253 : vector<1x8x8xf32> to vector<1x8x8xbf16>
    %255 = vector.extract_strided_slice %206 {offsets = [0, 0, 16], sizes = [1, 8, 8], strides = [1, 1, 1]} : vector<1x8x32xf32> to vector<1x8x8xf32>
    %256 = arith.truncf %255 : vector<1x8x8xf32> to vector<1x8x8xbf16>
    "tpu.trace_start"() <{level = 10 : i32, message = "bqd,bkd->bqk"}> : () -> ()
    %cst_74 = arith.constant dense<0.000000e+00> : vector<1x8x8xf32>
    %257 = tpu.matmul %252, %254, %cst_74 {dimension_numbers = #tpu.dot_dimension_numbers<[2], [2], [1], [1], [0, 0, 0, 1, 1, 1], [0], [0]>} : vector<1x8x8xbf16>, vector<1x8x8xbf16>, vector<1x8x8xf32> -> vector<1x8x8xf32>
    "tpu.trace_stop"() : () -> ()
    %cst_75 = arith.constant dense<0xFF800000> : vector<1x8xf32>
    %258 = vector.multi_reduction <maximumf>, %257, %cst_75 [2] : vector<1x8x8xf32> to vector<1x8xf32>
    %259 = vector.shape_cast %258 : vector<1x8xf32> to vector<1x8x1xf32>
    %260 = vector.broadcast %259 : vector<1x8x1xf32> to vector<1x8x8xf32>
    %261 = arith.subf %257, %260 : vector<1x8x8xf32>
    %262 = math.exp %261 : vector<1x8x8xf32>
    %cst_76 = arith.constant dense<0.000000e+00> : vector<1x8xf32>
    %263 = vector.multi_reduction <add>, %262, %cst_76 [2] : vector<1x8x8xf32> to vector<1x8xf32>
    %264 = vector.shape_cast %263 : vector<1x8xf32> to vector<1x8x1xf32>
    %265 = tpu.reciprocal %264 {approx = true} : vector<1x8x1xf32> -> vector<1x8x1xf32>
    %266 = vector.broadcast %265 : vector<1x8x1xf32> to vector<1x8x8xf32>
    %267 = arith.mulf %262, %266 : vector<1x8x8xf32>
    %268 = arith.truncf %267 : vector<1x8x8xf32> to vector<1x8x8xbf16>
    "tpu.trace_start"() <{level = 10 : i32, message = "bqk,bkd->bqd"}> : () -> ()
    %cst_77 = arith.constant dense<0.000000e+00> : vector<1x8x8xf32>
    %269 = tpu.matmul %268, %256, %cst_77 {dimension_numbers = #tpu.dot_dimension_numbers<[2], [1], [1], [2], [0, 0, 0, 1, 1, 2], [0], [0]>} : vector<1x8x8xbf16>, vector<1x8x8xbf16>, vector<1x8x8xf32> -> vector<1x8x8xf32>
    "tpu.trace_stop"() : () -> ()
    %270 = vector.extract_strided_slice %202 {offsets = [0, 0, 24], sizes = [1, 8, 8], strides = [1, 1, 1]} : vector<1x8x32xf32> to vector<1x8x8xf32>
    %cst_78 = arith.constant 0.353553385 : f32
    %271 = vector.broadcast %cst_78 : f32 to vector<1x8x8xf32>
    %272 = arith.mulf %270, %271 : vector<1x8x8xf32>
    %273 = arith.truncf %272 : vector<1x8x8xf32> to vector<1x8x8xbf16>
    %274 = vector.extract_strided_slice %204 {offsets = [0, 0, 24], sizes = [1, 8, 8], strides = [1, 1, 1]} : vector<1x8x32xf32> to vector<1x8x8xf32>
    %275 = arith.truncf %274 : vector<1x8x8xf32> to vector<1x8x8xbf16>
    %276 = vector.extract_strided_slice %206 {offsets = [0, 0, 24], sizes = [1, 8, 8], strides = [1, 1, 1]} : vector<1x8x32xf32> to vector<1x8x8xf32>
    %277 = arith.truncf %276 : vector<1x8x8xf32> to vector<1x8x8xbf16>
    "tpu.trace_start"() <{level = 10 : i32, message = "bqd,bkd->bqk"}> : () -> ()
    %cst_79 = arith.constant dense<0.000000e+00> : vector<1x8x8xf32>
    %278 = tpu.matmul %273, %275, %cst_79 {dimension_numbers = #tpu.dot_dimension_numbers<[2], [2], [1], [1], [0, 0, 0, 1, 1, 1], [0], [0]>} : vector<1x8x8xbf16>, vector<1x8x8xbf16>, vector<1x8x8xf32> -> vector<1x8x8xf32>
    "tpu.trace_stop"() : () -> ()
    %cst_80 = arith.constant dense<0xFF800000> : vector<1x8xf32>
    %279 = vector.multi_reduction <maximumf>, %278, %cst_80 [2] : vector<1x8x8xf32> to vector<1x8xf32>
    %280 = vector.shape_cast %279 : vector<1x8xf32> to vector<1x8x1xf32>
    %281 = vector.broadcast %280 : vector<1x8x1xf32> to vector<1x8x8xf32>
    %282 = arith.subf %278, %281 : vector<1x8x8xf32>
    %283 = math.exp %282 : vector<1x8x8xf32>
    %cst_81 = arith.constant dense<0.000000e+00> : vector<1x8xf32>
    %284 = vector.multi_reduction <add>, %283, %cst_81 [2] : vector<1x8x8xf32> to vector<1x8xf32>
    %285 = vector.shape_cast %284 : vector<1x8xf32> to vector<1x8x1xf32>
    %286 = tpu.reciprocal %285 {approx = true} : vector<1x8x1xf32> -> vector<1x8x1xf32>
    %287 = vector.broadcast %286 : vector<1x8x1xf32> to vector<1x8x8xf32>
    %288 = arith.mulf %283, %287 : vector<1x8x8xf32>
    %289 = arith.truncf %288 : vector<1x8x8xf32> to vector<1x8x8xbf16>
    "tpu.trace_start"() <{level = 10 : i32, message = "bqk,bkd->bqd"}> : () -> ()
    %cst_82 = arith.constant dense<0.000000e+00> : vector<1x8x8xf32>
    %290 = tpu.matmul %289, %277, %cst_82 {dimension_numbers = #tpu.dot_dimension_numbers<[2], [1], [1], [2], [0, 0, 0, 1, 1, 2], [0], [0]>} : vector<1x8x8xbf16>, vector<1x8x8xbf16>, vector<1x8x8xf32> -> vector<1x8x8xf32>
    "tpu.trace_stop"() : () -> ()
    %291 = tpu.concatenate %227, %248, %269, %290 in 2 : vector<1x8x8xf32>, vector<1x8x8xf32>, vector<1x8x8xf32>, vector<1x8x8xf32> -> vector<1x8x32xf32>
    %292 = vector.shape_cast %291 : vector<1x8x32xf32> to vector<8x32xf32>
    %293 = arith.truncf %292 : vector<8x32xf32> to vector<8x32xbf16>
    %c1_83 = arith.constant 1 : index
    %c0_84 = arith.constant 0 : index
    %c0_85 = arith.constant 0 : index
    %294 = vector.load %arg5[%c1_83, %c0_84, %c0_85] : memref<2x32x32xbf16, #tpu.memory_space<vmem>>, vector<1x32x32xbf16>
    %295 = vector.shape_cast %294 : vector<1x32x32xbf16> to vector<32x32xbf16>
    %cst_86 = arith.constant dense<0.000000e+00> : vector<8x32xf32>
    %296 = tpu.matmul %293, %295, %cst_86 {dimension_numbers = #tpu.dot_dimension_numbers<[1], [0], [0], [1], [0, 0, 1, 1], [], []>} : vector<8x32xbf16>, vector<32x32xbf16>, vector<8x32xf32> -> vector<8x32xf32>
    %297 = vector.broadcast %188 : vector<1x32xf32> to vector<8x32xf32>
    %298 = arith.addf %296, %297 : vector<8x32xf32>
    %299 = arith.addf %184, %298 : vector<8x32xf32>
    %cst_87 = arith.constant dense<0.000000e+00> : vector<8xf32>
    %300 = vector.multi_reduction <add>, %299, %cst_87 [1] : vector<8x32xf32> to vector<8xf32>
    %301 = vector.shape_cast %300 : vector<8xf32> to vector<8x1xf32>
    %cst_88 = arith.constant 3.200000e+01 : f32
    %302 = vector.broadcast %cst_88 : f32 to vector<8x1xf32>
    %303 = arith.divf %301, %302 : vector<8x1xf32>
    %304 = vector.broadcast %303 : vector<8x1xf32> to vector<8x32xf32>
    %305 = arith.subf %299, %304 : vector<8x32xf32>
    %306 = arith.mulf %305, %305 : vector<8x32xf32>
    %cst_89 = arith.constant dense<0.000000e+00> : vector<8xf32>
    %307 = vector.multi_reduction <add>, %306, %cst_89 [1] : vector<8x32xf32> to vector<8xf32>
    %308 = vector.shape_cast %307 : vector<8xf32> to vector<8x1xf32>
    %cst_90 = arith.constant 3.200000e+01 : f32
    %309 = vector.broadcast %cst_90 : f32 to vector<8x1xf32>
    %310 = arith.divf %308, %309 : vector<8x1xf32>
    %311 = vector.broadcast %303 : vector<8x1xf32> to vector<8x32xf32>
    %312 = arith.subf %299, %311 : vector<8x32xf32>
    %cst_91 = arith.constant 9.99999974E-6 : f32
    %313 = vector.broadcast %cst_91 : f32 to vector<8x1xf32>
    %314 = arith.addf %310, %313 : vector<8x1xf32>
    %315 = math.rsqrt %314 : vector<8x1xf32>
    %316 = vector.broadcast %315 : vector<8x1xf32> to vector<8x32xf32>
    %317 = arith.mulf %312, %316 : vector<8x32xf32>
    %318 = vector.broadcast %191 : vector<1x32xf32> to vector<8x32xf32>
    %319 = arith.mulf %317, %318 : vector<8x32xf32>
    %320 = vector.broadcast %192 : vector<1x32xf32> to vector<8x32xf32>
    %321 = arith.addf %319, %320 : vector<8x32xf32>
    %322 = arith.truncf %321 : vector<8x32xf32> to vector<8x32xbf16>
    %c1_92 = arith.constant 1 : index
    %c0_93 = arith.constant 0 : index
    %c0_94 = arith.constant 0 : index
    %323 = vector.load %arg6[%c1_92, %c0_93, %c0_94] : memref<2x32x64xbf16, #tpu.memory_space<vmem>>, vector<1x32x64xbf16>
    %324 = vector.shape_cast %323 : vector<1x32x64xbf16> to vector<32x64xbf16>
    %cst_95 = arith.constant dense<0.000000e+00> : vector<8x64xf32>
    %325 = tpu.matmul %322, %324, %cst_95 {dimension_numbers = #tpu.dot_dimension_numbers<[1], [0], [0], [1], [0, 0, 1, 1], [], []>} : vector<8x32xbf16>, vector<32x64xbf16>, vector<8x64xf32> -> vector<8x64xf32>
    %326 = vector.broadcast %189 : vector<1x64xf32> to vector<8x64xf32>
    %327 = arith.addf %325, %326 : vector<8x64xf32>
    %cst_96 = arith.constant 0.000000e+00 : f32
    %328 = vector.broadcast %cst_96 : f32 to vector<8x64xf32>
    %329 = arith.maximumf %327, %328 : vector<8x64xf32>
    %330 = arith.truncf %329 : vector<8x64xf32> to vector<8x64xbf16>
    %c1_97 = arith.constant 1 : index
    %c0_98 = arith.constant 0 : index
    %c0_99 = arith.constant 0 : index
    %331 = vector.load %arg7[%c1_97, %c0_98, %c0_99] : memref<2x64x32xbf16, #tpu.memory_space<vmem>>, vector<1x64x32xbf16>
    %332 = vector.shape_cast %331 : vector<1x64x32xbf16> to vector<64x32xbf16>
    %cst_100 = arith.constant dense<0.000000e+00> : vector<8x32xf32>
    %333 = tpu.matmul %330, %332, %cst_100 {dimension_numbers = #tpu.dot_dimension_numbers<[1], [0], [0], [1], [0, 0, 1, 1], [], []>} : vector<8x64xbf16>, vector<64x32xbf16>, vector<8x32xf32> -> vector<8x32xf32>
    %334 = vector.broadcast %190 : vector<1x32xf32> to vector<8x32xf32>
    %335 = arith.addf %333, %334 : vector<8x32xf32>
    %336 = arith.addf %321, %335 : vector<8x32xf32>
    %cst_101 = arith.constant dense<0.000000e+00> : vector<8xf32>
    %337 = vector.multi_reduction <add>, %336, %cst_101 [1] : vector<8x32xf32> to vector<8xf32>
    %338 = vector.shape_cast %337 : vector<8xf32> to vector<8x1xf32>
    %cst_102 = arith.constant 3.200000e+01 : f32
    %339 = vector.broadcast %cst_102 : f32 to vector<8x1xf32>
    %340 = arith.divf %338, %339 : vector<8x1xf32>
    %341 = vector.broadcast %340 : vector<8x1xf32> to vector<8x32xf32>
    %342 = arith.subf %336, %341 : vector<8x32xf32>
    %343 = arith.mulf %342, %342 : vector<8x32xf32>
    %cst_103 = arith.constant dense<0.000000e+00> : vector<8xf32>
    %344 = vector.multi_reduction <add>, %343, %cst_103 [1] : vector<8x32xf32> to vector<8xf32>
    %345 = vector.shape_cast %344 : vector<8xf32> to vector<8x1xf32>
    %cst_104 = arith.constant 3.200000e+01 : f32
    %346 = vector.broadcast %cst_104 : f32 to vector<8x1xf32>
    %347 = arith.divf %345, %346 : vector<8x1xf32>
    %348 = vector.broadcast %340 : vector<8x1xf32> to vector<8x32xf32>
    %349 = arith.subf %336, %348 : vector<8x32xf32>
    %cst_105 = arith.constant 9.99999974E-6 : f32
    %350 = vector.broadcast %cst_105 : f32 to vector<8x1xf32>
    %351 = arith.addf %347, %350 : vector<8x1xf32>
    %352 = math.rsqrt %351 : vector<8x1xf32>
    %353 = vector.broadcast %352 : vector<8x1xf32> to vector<8x32xf32>
    %354 = arith.mulf %349, %353 : vector<8x32xf32>
    %355 = vector.broadcast %193 : vector<1x32xf32> to vector<8x32xf32>
    %356 = arith.mulf %354, %355 : vector<8x32xf32>
    %357 = vector.broadcast %194 : vector<1x32xf32> to vector<8x32xf32>
    %358 = arith.addf %356, %357 : vector<8x32xf32>
    %359 = arith.truncf %358 : vector<8x32xf32> to vector<8x32xbf16>
    %c0_106 = arith.constant 0 : index
    %c0_107 = arith.constant 0 : index
    %360 = vector.load %arg9[%c0_106, %c0_107] : memref<32x128xbf16, #tpu.memory_space<vmem>>, vector<32x128xbf16>
    %cst_108 = arith.constant dense<0.000000e+00> : vector<8x128xf32>
    %361 = tpu.matmul %359, %360, %cst_108 {dimension_numbers = #tpu.dot_dimension_numbers<[1], [0], [0], [1], [0, 0, 1, 1], [], []>} : vector<8x32xbf16>, vector<32x128xbf16>, vector<8x128xf32> -> vector<8x128xf32>
    %c0_109 = arith.constant 0 : index
    %c0_110 = arith.constant 0 : index
    %362 = vector.load %arg10[%c0_109, %c0_110] : memref<1x128xf32, #tpu.memory_space<vmem>>, vector<1x128xf32>
    %363 = vector.broadcast %362 : vector<1x128xf32> to vector<8x128xf32>
    %364 = arith.addf %361, %363 : vector<8x128xf32>
    %c0_111 = arith.constant 0 : index
    %c0_112 = arith.constant 0 : index
    %365 = vector.load %arg11[%c0_111, %c0_112] : memref<8x128xf32, #tpu.memory_space<vmem>>, vector<8x128xf32>
    tpu.vector_store %arg11[%c0_111, %c0_112], %364 {strides = array<i32>} : memref<8x128xf32, #tpu.memory_space<vmem>>, vector<8x128xf32>,
    return
  }
  func.func @transform_0(%arg0: i32) -> (i32, i32) {
    %c0_i32 = arith.constant 0 : i32
    %c0_i32_0 = arith.constant 0 : i32
    return %arg0, %c0_i32 : i32, i32
  }
  func.func @transform_1(%arg0: i32) -> (i32, i32) {
    %c0_i32 = arith.constant 0 : i32
    %c0_i32_0 = arith.constant 0 : i32
    return %arg0, %c0_i32 : i32, i32
  }
  func.func @transform_2(%arg0: i32) -> (i32, i32) {
    %c0_i32 = arith.constant 0 : i32
    %c0_i32_0 = arith.constant 0 : i32
    %c0_i32_1 = arith.constant 0 : i32
    return %c0_i32, %c0_i32_0 : i32, i32
  }
  func.func @transform_3(%arg0: i32) -> (i32, i32, i32) {
    %c0_i32 = arith.constant 0 : i32
    %c0_i32_0 = arith.constant 0 : i32
    %c0_i32_1 = arith.constant 0 : i32
    %c0_i32_2 = arith.constant 0 : i32
    return %c0_i32, %c0_i32_0, %c0_i32_1 : i32, i32, i32
  }
  func.func @transform_4(%arg0: i32) -> (i32, i32, i32) {
    %c0_i32 = arith.constant 0 : i32
    %c0_i32_0 = arith.constant 0 : i32
    %c0_i32_1 = arith.constant 0 : i32
    %c0_i32_2 = arith.constant 0 : i32
    return %c0_i32, %c0_i32_0, %c0_i32_1 : i32, i32, i32
  }
  func.func @transform_5(%arg0: i32) -> (i32, i32, i32) {
    %c0_i32 = arith.constant 0 : i32
    %c0_i32_0 = arith.constant 0 : i32
    %c0_i32_1 = arith.constant 0 : i32
    %c0_i32_2 = arith.constant 0 : i32
    return %c0_i32, %c0_i32_0, %c0_i32_1 : i32, i32, i32
  }
  func.func @transform_6(%arg0: i32) -> (i32, i32, i32) {
    %c0_i32 = arith.constant 0 : i32
    %c0_i32_0 = arith.constant 0 : i32
    %c0_i32_1 = arith.constant 0 : i32
    %c0_i32_2 = arith.constant 0 : i32
    return %c0_i32, %c0_i32_0, %c0_i32_1 : i32, i32, i32
  }
  func.func @transform_7(%arg0: i32) -> (i32, i32, i32) {
    %c0_i32 = arith.constant 0 : i32
    %c0_i32_0 = arith.constant 0 : i32
    %c0_i32_1 = arith.constant 0 : i32
    %c0_i32_2 = arith.constant 0 : i32
    return %c0_i32, %c0_i32_0, %c0_i32_1 : i32, i32, i32
  }
  func.func @transform_8(%arg0: i32) -> (i32, i32) {
    %c0_i32 = arith.constant 0 : i32
    %c0_i32_0 = arith.constant 0 : i32
    %c0_i32_1 = arith.constant 0 : i32
    return %c0_i32, %c0_i32_0 : i32, i32
  }
  func.func @transform_9(%arg0: i32) -> (i32, i32) {
    %c0_i32 = arith.constant 0 : i32
    %c0_i32_0 = arith.constant 0 : i32
    %c0_i32_1 = arith.constant 0 : i32
    return %c0_i32, %c0_i32_0 : i32, i32
  }
  func.func @transform_10(%arg0: i32) -> (i32, i32) {
    %c0_i32 = arith.constant 0 : i32
    %c0_i32_0 = arith.constant 0 : i32
    return %arg0, %c0_i32 : i32, i32
  }
}

</mosaic_0001>

<llo_original>
// kernel: _lambda_.1
$region0: #{_lambda_.1}
  #allocation0 [shape = 'u32[]', space=smem, size = 0x4, offset = 0x4, fixed_abs, tag = 'smem constant byte address 0x4 - core index']
  #allocation1 [shape = 'u32[144,128]{1,0:T(1,128)}', space=vmem, size = 0x12000, scoped, tag = 'internal scratch']
  %s0 = inlined_call_operand.vmem [shape: s32[16,1], index: 0, kind: input, shape index: {}]
  %s1 = inlined_call_operand.vmem [shape: f32[16,32], index: 1, kind: input, shape index: {}]
  %s2 = inlined_call_operand.vmem [shape: f32[64,32], index: 2, kind: input, shape index: {}]
  %s3 = inlined_call_operand.vmem [shape: bf16[2,32,96], index: 3, kind: input, shape index: {}]
  %s4 = inlined_call_operand.vmem [shape: bf16[2,32,32], index: 4, kind: input, shape index: {}]
  %s5 = inlined_call_operand.vmem [shape: bf16[2,32,64], index: 5, kind: input, shape index: {}]
  %s6 = inlined_call_operand.vmem [shape: bf16[2,64,32], index: 6, kind: input, shape index: {}]
  %s7 = inlined_call_operand.vmem [shape: f32[2,8,128], index: 7, kind: input, shape index: {}]
  %s8 = inlined_call_operand.vmem [shape: bf16[32,128], index: 8, kind: input, shape index: {}]
  %s9 = inlined_call_operand.vmem [shape: f32[1,128], index: 9, kind: input, shape index: {}]
  %s10 = inlined_call_operand.hbm [shape: f32[16,128], index: 10, kind: output, shape index: {}]
  %s11 = sld [smem:[#allocation0]]
  $region73: #{_lambda_.1} parent=0
    _
  %s13 = ssub.s32 1, %s11
  %s14 = scalar_select 0, %s13, %s11
  $region1: #{_lambda_.1} parent=0
    #allocation2 [shape = 'u8[8192]{0}', space=vmem, size = 0x2000, scoped, tag = 'output window, operand 0']
    #allocation3 [shape = 's32[2]{0}', space=sflag, size = 0x8, scoped, tag = 'scoped memory for _lambda_.1']
    %15 = vsyncpa [#allocation3], 0
    %s16 = scalar_lea.sflag [#allocation3], 1
    %17 = vsyncpa %s16, 0
    loop: start=0, step=1, limit=4
    $region2: #{_lambda_.1} parent=1 // loop_pre_header
      _
    $region3: #{_lambda_.1} parent=1 // loop_header
      %s19 = sphi 0, %s23
      %p20 = scmp.ge.s32.totalorder %s19, 4
      %s29 = sphi 0, %s31
      %s32 = sphi 0, %s29
      %s33 = sphi 0, %s32
      %s49 = sphi 0, %s33
      %s55 = sphi 0, %s57
      %s58 = sphi 0, %s55
      %s59 = sphi 0, %s58
      %s75 = sphi 0, %s59
      %s79 = sphi 0, %s79
      %s81 = sphi 0, %s79
      %s82 = sphi 0, %s81
      %s96 = sphi 0, %s82
      %s100 = sphi 0, %s100
      %s102 = sphi 0, %s100
      %s103 = sphi 0, %s102
      %s117 = sphi 0, %s103
      %s121 = sphi 0, %s121
      %s123 = sphi 0, %s121
      %s124 = sphi 0, %s123
      %s138 = sphi 0, %s124
      %s142 = sphi 0, %s142
      %s144 = sphi 0, %s142
      %s145 = sphi 0, %s144
      %s159 = sphi 0, %s145
      %s163 = sphi 0, %s163
      %s165 = sphi 0, %s163
      %s166 = sphi 0, %s165
      %s180 = sphi 0, %s166
      %s184 = sphi 0, %s184
      %s186 = sphi 0, %s184
      %s187 = sphi 0, %s186
      %s201 = sphi 0, %s187
      %s205 = sphi 0, %s205
      %s207 = sphi 0, %s205
      %s208 = sphi 0, %s207
      %s222 = sphi 0, %s208
      %s226 = sphi 0, %s226
      %s228 = sphi 0, %s226
      %s229 = sphi 0, %s228
      %s243 = sphi 0, %s229
      %s249 = sphi 0, %s251
      %s252 = sphi 0, %s249
      %s253 = sphi 0, %s252
      %s269 = sphi 0, %s253
    $region4: #{_lambda_.1} parent=1 // loop_header_branch
      %22 = sbr.rel (%p20) target = $region8
    $region5: #{_lambda_.1} parent=1 // loop_body
      %s24 = ssub.s32 %s19, 1
      %s25 = ssub.s32 %s19, 2
      %s26 = sadd.s32 %s19, 1
      %s27 = ssub.s32 %s19, %s26
      %p28 = scmp.eq.s32.totalorder %s27, 0
      %s30 = sadd.s32 %s29, 1
      %s31 = scalar_select %p28, %s29, %s30
      %p34 = pneg %p28
      %p35 = scmp.eq.s32.totalorder %s19, 1
      %p36 = por %p34, %p35
      %p37 = scmp.ne.s32.totalorder %s29, %s32
      %p38 = scmp.eq.s32.totalorder %s19, 0
      %p39 = por %p37, %p38
      %p40 = scmp.ne.s32.totalorder %s29, %s32
      %p41 = scmp.eq.s32.totalorder %s24, 1
      %p42 = por %p40, %p41
      %p43 = scmp.ne.s32.totalorder %s32, %s33
      %p44 = scmp.eq.s32.totalorder %s24, 0
      %p45 = por %p43, %p44
      %p46 = scmp.ne.s32.totalorder %s32, %s33
      %p47 = scmp.eq.s32.totalorder %s25, 1
      %p48 = por %p46, %p47
      %p50 = scmp.ne.s32.totalorder %s33, %s49
      %p51 = scmp.eq.s32.totalorder %s25, 0
      %p52 = por %p50, %p51
      %s53 = ssub.s32 %s19, %s26
      %p54 = scmp.eq.s32.totalorder %s53, 0
      %s56 = sadd.s32 %s55, 1
      %s57 = scalar_select %p54, %s55, %s56
      %p60 = pneg %p54
      %p61 = scmp.eq.s32.totalorder %s19, 1
      %p62 = por %p60, %p61
      %p63 = scmp.ne.s32.totalorder %s55, %s58
      %p64 = scmp.eq.s32.totalorder %s19, 0
      %p65 = por %p63, %p64
      %p66 = scmp.ne.s32.totalorder %s55, %s58
      %p67 = scmp.eq.s32.totalorder %s24, 1
      %p68 = por %p66, %p67
      %p69 = scmp.ne.s32.totalorder %s58, %s59
      %p70 = scmp.eq.s32.totalorder %s24, 0
      %p71 = por %p69, %p70
      %p72 = scmp.ne.s32.totalorder %s58, %s59
      %p73 = scmp.eq.s32.totalorder %s25, 1
      %p74 = por %p72, %p73
      %p76 = scmp.ne.s32.totalorder %s59, %s75
      %p77 = scmp.eq.s32.totalorder %s25, 0
      %p78 = por %p76, %p77
      %s80 = sadd.s32 %s79, 1
      %p83 = scmp.eq.s32.totalorder %s19, 1
      %p84 = scmp.ne.s32.totalorder %s79, %s81
      %p85 = scmp.eq.s32.totalorder %s19, 0
      %p86 = por %p84, %p85
      %p87 = scmp.ne.s32.totalorder %s79, %s81
      %p88 = scmp.eq.s32.totalorder %s24, 1
      %p89 = por %p87, %p88
      %p90 = scmp.ne.s32.totalorder %s81, %s82
      %p91 = scmp.eq.s32.totalorder %s24, 0
      %p92 = por %p90, %p91
      %p93 = scmp.ne.s32.totalorder %s81, %s82
      %p94 = scmp.eq.s32.totalorder %s25, 1
      %p95 = por %p93, %p94
      %p97 = scmp.ne.s32.totalorder %s82, %s96
      %p98 = scmp.eq.s32.totalorder %s25, 0
      %p99 = por %p97, %p98
      %s101 = sadd.s32 %s100, 1
      %p104 = scmp.eq.s32.totalorder %s19, 1
      %p105 = scmp.ne.s32.totalorder %s100, %s102
      %p106 = scmp.eq.s32.totalorder %s19, 0
      %p107 = por %p105, %p106
      %p108 = scmp.ne.s32.totalorder %s100, %s102
      %p109 = scmp.eq.s32.totalorder %s24, 1
      %p110 = por %p108, %p109
      %p111 = scmp.ne.s32.totalorder %s102, %s103
      %p112 = scmp.eq.s32.totalorder %s24, 0
      %p113 = por %p111, %p112
      %p114 = scmp.ne.s32.totalorder %s102, %s103
      %p115 = scmp.eq.s32.totalorder %s25, 1
      %p116 = por %p114, %p115
      %p118 = scmp.ne.s32.totalorder %s103, %s117
      %p119 = scmp.eq.s32.totalorder %s25, 0
      %p120 = por %p118, %p119
      %s122 = sadd.s32 %s121, 1
      %p125 = scmp.eq.s32.totalorder %s19, 1
      %p126 = scmp.ne.s32.totalorder %s121, %s123
      %p127 = scmp.eq.s32.totalorder %s19, 0
      %p128 = por %p126, %p127
      %p129 = scmp.ne.s32.totalorder %s121, %s123
      %p130 = scmp.eq.s32.totalorder %s24, 1
      %p131 = por %p129, %p130
      %p132 = scmp.ne.s32.totalorder %s123, %s124
      %p133 = scmp.eq.s32.totalorder %s24, 0
      %p134 = por %p132, %p133
      %p135 = scmp.ne.s32.totalorder %s123, %s124
      %p136 = scmp.eq.s32.totalorder %s25, 1
      %p137 = por %p135, %p136
      %p139 = scmp.ne.s32.totalorder %s124, %s138
      %p140 = scmp.eq.s32.totalorder %s25, 0
      %p141 = por %p139, %p140
      %s143 = sadd.s32 %s142, 1
      %p146 = scmp.eq.s32.totalorder %s19, 1
      %p147 = scmp.ne.s32.totalorder %s142, %s144
      %p148 = scmp.eq.s32.totalorder %s19, 0
      %p149 = por %p147, %p148
      %p150 = scmp.ne.s32.totalorder %s142, %s144
      %p151 = scmp.eq.s32.totalorder %s24, 1
      %p152 = por %p150, %p151
      %p153 = scmp.ne.s32.totalorder %s144, %s145
      %p154 = scmp.eq.s32.totalorder %s24, 0
      %p155 = por %p153, %p154
      %p156 = scmp.ne.s32.totalorder %s144, %s145
      %p157 = scmp.eq.s32.totalorder %s25, 1
      %p158 = por %p156, %p157
      %p160 = scmp.ne.s32.totalorder %s145, %s159
      %p161 = scmp.eq.s32.totalorder %s25, 0
      %p162 = por %p160, %p161
      %s164 = sadd.s32 %s163, 1
      %p167 = scmp.eq.s32.totalorder %s19, 1
      %p168 = scmp.ne.s32.totalorder %s163, %s165
      %p169 = scmp.eq.s32.totalorder %s19, 0
      %p170 = por %p168, %p169
      %p171 = scmp.ne.s32.totalorder %s163, %s165
      %p172 = scmp.eq.s32.totalorder %s24, 1
      %p173 = por %p171, %p172
      %p174 = scmp.ne.s32.totalorder %s165, %s166
      %p175 = scmp.eq.s32.totalorder %s24, 0
      %p176 = por %p174, %p175
      %p177 = scmp.ne.s32.totalorder %s165, %s166
      %p178 = scmp.eq.s32.totalorder %s25, 1
      %p179 = por %p177, %p178
      %p181 = scmp.ne.s32.totalorder %s166, %s180
      %p182 = scmp.eq.s32.totalorder %s25, 0
      %p183 = por %p181, %p182
      %s185 = sadd.s32 %s184, 1
      %p188 = scmp.eq.s32.totalorder %s19, 1
      %p189 = scmp.ne.s32.totalorder %s184, %s186
      %p190 = scmp.eq.s32.totalorder %s19, 0
      %p191 = por %p189, %p190
      %p192 = scmp.ne.s32.totalorder %s184, %s186
      %p193 = scmp.eq.s32.totalorder %s24, 1
      %p194 = por %p192, %p193
      %p195 = scmp.ne.s32.totalorder %s186, %s187
      %p196 = scmp.eq.s32.totalorder %s24, 0
      %p197 = por %p195, %p196
      %p198 = scmp.ne.s32.totalorder %s186, %s187
      %p199 = scmp.eq.s32.totalorder %s25, 1
      %p200 = por %p198, %p199
      %p202 = scmp.ne.s32.totalorder %s187, %s201
      %p203 = scmp.eq.s32.totalorder %s25, 0
      %p204 = por %p202, %p203
      %s206 = sadd.s32 %s205, 1
      %p209 = scmp.eq.s32.totalorder %s19, 1
      %p210 = scmp.ne.s32.totalorder %s205, %s207
      %p211 = scmp.eq.s32.totalorder %s19, 0
      %p212 = por %p210, %p211
      %p213 = scmp.ne.s32.totalorder %s205, %s207
      %p214 = scmp.eq.s32.totalorder %s24, 1
      %p215 = por %p213, %p214
      %p216 = scmp.ne.s32.totalorder %s207, %s208
      %p217 = scmp.eq.s32.totalorder %s24, 0
      %p218 = por %p216, %p217
      %p219 = scmp.ne.s32.totalorder %s207, %s208
      %p220 = scmp.eq.s32.totalorder %s25, 1
      %p221 = por %p219, %p220
      %p223 = scmp.ne.s32.totalorder %s208, %s222
      %p224 = scmp.eq.s32.totalorder %s25, 0
      %p225 = por %p223, %p224
      %s227 = sadd.s32 %s226, 1
      %p230 = scmp.eq.s32.totalorder %s19, 1
      %p231 = scmp.ne.s32.totalorder %s226, %s228
      %p232 = scmp.eq.s32.totalorder %s19, 0
      %p233 = por %p231, %p232
      %p234 = scmp.ne.s32.totalorder %s226, %s228
      %p235 = scmp.eq.s32.totalorder %s24, 1
      %p236 = por %p234, %p235
      %p237 = scmp.ne.s32.totalorder %s228, %s229
      %p238 = scmp.eq.s32.totalorder %s24, 0
      %p239 = por %p237, %p238
      %p240 = scmp.ne.s32.totalorder %s228, %s229
      %p241 = scmp.eq.s32.totalorder %s25, 1
      %p242 = por %p240, %p241
      %p244 = scmp.ne.s32.totalorder %s229, %s243
      %p245 = scmp.eq.s32.totalorder %s25, 0
      %p246 = por %p244, %p245
      %s247 = ssub.s32 %s19, %s26
      %p248 = scmp.eq.s32.totalorder %s247, 0
      %s250 = sadd.s32 %s249, 1
      %s251 = scalar_select %p248, %s249, %s250
      %p254 = pneg %p248
      %p255 = scmp.eq.s32.totalorder %s19, 1
      %p256 = por %p254, %p255
      %p257 = scmp.ne.s32.totalorder %s249, %s252
      %p258 = scmp.eq.s32.totalorder %s19, 0
      %p259 = por %p257, %p258
      %p260 = scmp.ne.s32.totalorder %s249, %s252
      %p261 = scmp.eq.s32.totalorder %s24, 1
      %p262 = por %p260, %p261
      %p263 = scmp.ne.s32.totalorder %s252, %s253
      %p264 = scmp.eq.s32.totalorder %s24, 0
      %p265 = por %p263, %p264
      %p266 = scmp.ne.s32.totalorder %s252, %s253
      %p267 = scmp.eq.s32.totalorder %s25, 1
      %p268 = por %p266, %p267
      %p270 = scmp.ne.s32.totalorder %s253, %s269
      %p271 = scmp.eq.s32.totalorder %s25, 0
      %p272 = por %p270, %p271
      %p273 = scmp.le.s32.totalorder 1, %s19
      %p274 = scmp.lt.s32.totalorder %s19, 3
      %p275 = pnand %p273, %p274
      %p276 = pneg %p275
      // Predicated region
      $region9: #{_lambda_.1} parent=5 // pred_check
        _
      $region10: #{_lambda_.1} parent=5 // pred_check_branch
        %278 = sbr.rel (%p275) target = $region12
      $region11: #{_lambda_.1} parent=5 // pred_region
        %s279 = ssub.s32 %s19, 1
        // Predicated region
        $region13: #{_lambda_.1} parent=11 // pred_check
          %p280 = pneg %p92
        $region14: #{_lambda_.1} parent=11 // pred_check_branch
          %282 = sbr.rel (%p280) target = $region16
        $region15: #{_lambda_.1} parent=11 // pred_region
          _
        $region16: #{_lambda_.1} parent=11 // pred_fallthru
          _
        // Predicated region
        $region17: #{_lambda_.1} parent=11 // pred_check
          %p283 = pneg %p113
        $region18: #{_lambda_.1} parent=11 // pred_check_branch
          %285 = sbr.rel (%p283) target = $region20
        $region19: #{_lambda_.1} parent=11 // pred_region
          _
        $region20: #{_lambda_.1} parent=11 // pred_fallthru
          _
        // Predicated region
        $region21: #{_lambda_.1} parent=11 // pred_check
          %p286 = pneg %p134
        $region22: #{_lambda_.1} parent=11 // pred_check_branch
          %288 = sbr.rel (%p286) target = $region24
        $region23: #{_lambda_.1} parent=11 // pred_region
          _
        $region24: #{_lambda_.1} parent=11 // pred_fallthru
          _
        // Predicated region
        $region25: #{_lambda_.1} parent=11 // pred_check
          %p289 = pneg %p155
        $region26: #{_lambda_.1} parent=11 // pred_check_branch
          %291 = sbr.rel (%p289) target = $region28
        $region27: #{_lambda_.1} parent=11 // pred_region
          _
        $region28: #{_lambda_.1} parent=11 // pred_fallthru
          _
        // Predicated region
        $region29: #{_lambda_.1} parent=11 // pred_check
          %p292 = pneg %p176
        $region30: #{_lambda_.1} parent=11 // pred_check_branch
          %294 = sbr.rel (%p292) target = $region32
        $region31: #{_lambda_.1} parent=11 // pred_region
          _
        $region32: #{_lambda_.1} parent=11 // pred_fallthru
          _
        // Predicated region
        $region33: #{_lambda_.1} parent=11 // pred_check
          %p295 = pneg %p197
        $region34: #{_lambda_.1} parent=11 // pred_check_branch
          %297 = sbr.rel (%p295) target = $region36
        $region35: #{_lambda_.1} parent=11 // pred_region
          _
        $region36: #{_lambda_.1} parent=11 // pred_fallthru
          _
        // Predicated region
        $region37: #{_lambda_.1} parent=11 // pred_check
          %p298 = pneg %p218
        $region38: #{_lambda_.1} parent=11 // pred_check_branch
          %300 = sbr.rel (%p298) target = $region40
        $region39: #{_lambda_.1} parent=11 // pred_region
          _
        $region40: #{_lambda_.1} parent=11 // pred_fallthru
          _
        // Predicated region
        $region41: #{_lambda_.1} parent=11 // pred_check
          %p301 = pneg %p239
        $region42: #{_lambda_.1} parent=11 // pred_check_branch
          %303 = sbr.rel (%p301) target = $region44
        $region43: #{_lambda_.1} parent=11 // pred_region
          _
        $region44: #{_lambda_.1} parent=11 // pred_fallthru
          _
      $region12: #{_lambda_.1} parent=5 // pred_fallthru
        _
      %p304 = scmp.lt.s32.totalorder %s19, 2
      // Predicated region
      $region45: #{_lambda_.1} parent=5 // pred_check
        %p305 = pneg %p304
      $region46: #{_lambda_.1} parent=5 // pred_check_branch
        %307 = sbr.rel (%p305) target = $region48
      $region47: #{_lambda_.1} parent=5 // pred_region
        // Predicated region
        $region49: #{_lambda_.1} parent=47 // pred_check
          %p308 = pneg %p39
        $region50: #{_lambda_.1} parent=47 // pred_check_branch
          %310 = sbr.rel (%p308) target = $region52
        $region51: #{_lambda_.1} parent=47 // pred_region
          %p311 = scmp.lt.s32.totalorder %s19, 1
          %s312 = scalar_select %p311, %s19, 1
          %s313 = smul.addr %s312, 8
          %s314 = scalar_lea.vmem %s0, %s313
        $region52: #{_lambda_.1} parent=47 // pred_fallthru
          _
        // Predicated region
        $region53: #{_lambda_.1} parent=47 // pred_check
          %p315 = pneg %p65
        $region54: #{_lambda_.1} parent=47 // pred_check_branch
          %317 = sbr.rel (%p315) target = $region56
        $region55: #{_lambda_.1} parent=47 // pred_region
          %p318 = scmp.lt.s32.totalorder %s19, 1
          %s319 = scalar_select %p318, %s19, 1
          %s320 = smul.addr %s319, 8
          %s321 = scalar_lea.vmem %s1, %s320
        $region56: #{_lambda_.1} parent=47 // pred_fallthru
          _
      $region48: #{_lambda_.1} parent=5 // pred_fallthru
        _
      %p322 = scmp.le.s32.totalorder 1, %s19
      %p323 = scmp.lt.s32.totalorder %s19, 3
      %p324 = pnand %p322, %p323
      %p325 = pneg %p324
      // Predicated region
      $region57: #{_lambda_.1} parent=5 // pred_check
        _
      $region58: #{_lambda_.1} parent=5 // pred_check_branch
        %327 = sbr.rel (%p324) target = $region60
      $region59: #{_lambda_.1} parent=5 // pred_region
        %s328 = ssub.s32 %s19, 1
        %p329 = scmp.lt.s32.totalorder %s24, 1
        %s330 = scalar_select %p329, %s24, 1
        %s331 = smul.addr %s330, 8
        %s332 = scalar_lea.vmem %s0, %s331
        %p333 = pneg %p45
        %p334 = pneg %p42
        %p335 = scmp.lt.s32.totalorder %s24, 1
        %s336 = scalar_select %p335, %s24, 1
        %s337 = smul.addr %s336, 8
        %s338 = scalar_lea.vmem %s1, %s337
        %p339 = pneg %p71
        %p340 = pneg %p68
        %p341 = pneg %p92
        %p342 = pneg %p89
        %p343 = pneg %p113
        %p344 = pneg %p110
        %p345 = pneg %p134
        %p346 = pneg %p131
        %p347 = pneg %p155
        %p348 = pneg %p152
        %p349 = pneg %p176
        %p350 = pneg %p173
        %p351 = pneg %p197
        %p352 = pneg %p194
        %p353 = pneg %p218
        %p354 = pneg %p215
        %p355 = pneg %p239
        %p356 = pneg %p236
        %p357 = pneg %p265
        %p358 = pneg %p262
        %s359 = sand.u32 %s252, 1
        %s360 = scalar_lea.sflag [#allocation3], %s359
        %s361 = sand.u32 %s252, 1
        %s362 = smul.addr %s361, 8
        %s363 = scalar_lea.vmem [#allocation2], %s362
        %p364 = scmp.lt.s32.totalorder %s24, 1
        %s365 = scalar_select %p364, %s24, 1
        %s366 = smul.addr %s365, 8
        %s367 = scalar_lea.vmem %s0, %s366
        %p368 = scmp.lt.s32.totalorder %s24, 1
        %s369 = scalar_select %p368, %s24, 1
        %s370 = smul.addr %s369, 8
        %s371 = scalar_lea.vmem %s1, %s370
        %v373 = vld [vmem:[%s367] sm:$0xff]
        %v374 = vlaneseq
        %v375 = vand.u32 %v374, 127
        %376 = vset.pattern.permute.xlu0 0
        %377 = vperm.xlu0 %376, %v373
        %v378 = vpop.permute.xlu0 %377
        %vm379 = vcmp.eq.s32.totalorder %v375, %v378
        %v380 = vsel %vm379, 1.0, 0.0
        %v381 = vld [vmem:[%s2] sm:$0xff]
        %v382 = vld [vmem:[%s2 + $0x8] sm:$0xff]
        %v383 = vld [vmem:[%s2 + $0x10] sm:$0xff]
        %v384 = vld [vmem:[%s2 + $0x18] sm:$0xff]
        %v385 = vld [vmem:[%s2 + $0x20] sm:$0xff]
        %v386 = vld [vmem:[%s2 + $0x28] sm:$0xff]
        %v387 = vld [vmem:[%s2 + $0x30] sm:$0xff]
        %v388 = vld [vmem:[%s2 + $0x38] sm:$0xff]
        %v389 = vld [vmem:[%s371] sm:$0xff]
        %vm390 = vcmask 523264
        %v392 = vsel %vm390, %v380, 0
        %394 = vmatprep.subr.mxu0 0.0
        %395 = vmatpush1.msra.mxu0 %v381
        %396 = vmatprep.subr.mxu0 0.0
        %397 = vmatpush1.msra.mxu0 %v382
        %398 = vmatprep.subr.mxu0 0.0
        %399 = vmatpush1.msra.mxu0 %v383
        %400 = vmatprep.subr.mxu0 0.0
        %401 = vmatpush1.msra.mxu0 %v384
        %402 = vmatprep.subr.mxu0 0.0
        %403 = vmatpush1.msra.mxu0 %v385
        %404 = vmatprep.subr.mxu0 0.0
        %405 = vmatpush1.msra.mxu0 %v386
        %406 = vmatprep.subr.mxu0 0.0
        %407 = vmatpush1.msra.mxu0 %v387
        %408 = vmatprep.subr.mxu0 0.0
        %409 = vmatpush1.msra.mxu0 %v388
        %410 = vmatprep.subr.mxu0 0.0
        %411 = vmatpush1.msra.mxu0 0.0
        %412 = vmatprep.subr.mxu0 0.0
        %413 = vmatpush1.msra.mxu0 0.0
        %414 = vmatprep.subr.mxu0 0.0
        %415 = vmatpush1.msra.mxu0 0.0
        %416 = vmatprep.subr.mxu0 0.0
        %417 = vmatpush1.msra.mxu0 0.0
        %418 = vmatprep.subr.mxu0 0.0
        %419 = vmatpush1.msra.mxu0 0.0
        %420 = vmatprep.subr.mxu0 0.0
        %421 = vmatpush1.msra.mxu0 0.0
        %422 = vmatprep.subr.mxu0 0.0
        %423 = vmatpush1.msra.mxu0 0.0
        %424 = vmatprep.subr.mxu0 0.0
        %425 = vmatpush1.msra.mxu0 0.0
        %426 = vmatprep.subr.mxu0 0.0
        %427 = vmatpush1.msra.mxu0 0.0
        %428 = vmatprep.subr.mxu0 0.0
        %429 = vmatpush1.msra.mxu0 0.0
        %430 = vmatprep.subr.mxu0 0.0
        %431 = vmatpush1.msra.mxu0 0.0
        %432 = vmatprep.subr.mxu0 0.0
        %433 = vmatpush1.msra.mxu0 0.0
        %434 = vmatprep.subr.mxu0 0.0
        %435 = vmatpush1.msra.mxu0 0.0
        %436 = vmatprep.subr.mxu0 0.0
        %437 = vmatpush1.msra.mxu0 0.0
        %438 = vmatprep.subr.mxu0 0.0
        %439 = vmatpush1.msra.mxu0 0.0
        %440 = vmatprep.subr.mxu0 0.0
        %441 = vmatpush1.msra.mxu0 0.0
        %442 = vmatprep.subr.mxu0 0.0
        %443 = vmatpush1.msra.mxu0 0.0
        %444 = vmatprep.subr.mxu0 0.0
        %445 = vmatpush1.msra.mxu0 0.0
        %446 = vmatprep.subr.mxu0 0.0
        %447 = vmatpush1.msra.mxu0 0.0
        %448 = vmatprep.subr.mxu0 0.0
        %449 = vmatpush1.msra.mxu0 0.0
        %450 = vmatprep.subr.mxu0 0.0
        %451 = vmatpush1.msra.mxu0 0.0
        %452 = vmatprep.subr.mxu0 0.0
        %453 = vmatpush1.msra.mxu0 0.0
        %454 = vmatprep.subr.mxu0 0.0
        %455 = vmatpush1.msra.mxu0 0.0
        %456 = vmatprep.subr.mxu0 0.0
        %457 = vmatpush1.msra.mxu0 0.0
        %458 = vmatprep.mubr.f32.mxu0 0.0
        %459 = vmatmul.mubr.f32.gmra.mrb[0].mxu0 %v392
        %v460 = vpop.f32.mrb[0].mxu0
        %v461 = vadd.f32 %v389, %v460
        %v462 = vpop.f32.mrb[0].mxu0
        %463 = vdwg.mxu0
        %v464 = vld [vmem:[%s7] sm:$0xff]
        %v465 = vpack.c.bf16 %v461, %v461
        %v466 = vld [vmem:[%s3] sm:$0xf]
        %v467 = vld [vmem:[%s3 + $0x4] sm:$0xf]
        %v468 = vld [vmem:[%s3 + $0x8] sm:$0xf]
        %v469 = vld [vmem:[%s3 + $0xc] sm:$0xf]
        %v470 = vlaneseq
        %v471 = vshrl.u32 %v470, 7
        %v472 = vsub.s32 0, %v471
        %v473 = vrot.slane %v464, %v472
        %v478 = vunpack.c.l.b16 %v466
        %v479 = vunpack.c.l.b16 %v467
        %v480 = vunpack.c.l.b16 %v468
        %v481 = vunpack.c.l.b16 %v469
        %v482 = vpack.c.b16 %v479, %v478
        %v483 = vpack.c.b16 %v481, %v480
        %vm486 = vcmask 261120
        %v488 = vsel %vm486, %v465, 0
        %490 = vmatprep.subr.bf16.mxu0 0
        %491 = vmatpush1.bf16.msra.mxu0 %v482
        %492 = vmatprep.subr.bf16.mxu0 0
        %493 = vmatpush1.bf16.msra.mxu0 %v483
        %494 = vmatprep.subr.bf16.mxu0 0
        %495 = vmatpush1.bf16.msra.mxu0 0
        %496 = vmatprep.subr.bf16.mxu0 0
        %497 = vmatpush1.bf16.msra.mxu0 0
        %498 = vmatprep.subr.bf16.mxu0 0
        %499 = vmatpush1.bf16.msra.mxu0 0
        %500 = vmatprep.subr.bf16.mxu0 0
        %501 = vmatpush1.bf16.msra.mxu0 0
        %502 = vmatprep.subr.bf16.mxu0 0
        %503 = vmatpush1.bf16.msra.mxu0 0
        %504 = vmatprep.subr.bf16.mxu0 0
        %505 = vmatpush1.bf16.msra.mxu0 0
        %506 = vmatprep.subr.bf16.mxu0 0
        %507 = vmatpush1.bf16.msra.mxu0 0
        %508 = vmatprep.subr.bf16.mxu0 0
        %509 = vmatpush1.bf16.msra.mxu0 0
        %510 = vmatprep.subr.bf16.mxu0 0
        %511 = vmatpush1.bf16.msra.mxu0 0
        %512 = vmatprep.subr.bf16.mxu0 0
        %513 = vmatpush1.bf16.msra.mxu0 0
        %514 = vmatprep.subr.bf16.mxu0 0
        %515 = vmatpush1.bf16.msra.mxu0 0
        %516 = vmatprep.subr.bf16.mxu0 0
        %517 = vmatpush1.bf16.msra.mxu0 0
        %518 = vmatprep.subr.bf16.mxu0 0
        %519 = vmatpush1.bf16.msra.mxu0 0
        %520 = vmatprep.subr.bf16.mxu0 0
        %521 = vmatpush1.bf16.msra.mxu0 0
        %522 = vmatprep.mubr.bf16.mxu0 0
        %523 = vmatmul.mubr.bf16.gmra.mrb[0].mxu0 %v488
        %v524 = vpop.f32.mrb[0].mxu0
        %v525 = vadd.f32 %v473, %v524
        %v526 = vpop.f32.mrb[0].mxu0
        %v527 = vpop.f32.mrb[0].mxu0
        %v528 = vpop.f32.mrb[0].mxu0
        %529 = vdwg.mxu0
        %v530 = vmul.f32 %v525, 0.35355338
        %v531 = vpack.c.bf16 %v530, %v530
        %v532 = vpack.c.bf16 %v525, %v525
        %534 = vrot.lane.b32.xlu0 %v532, 96
        %v535 = vpop.permute.xlu0 %534
        %vm536 = vcmask 64512
        %v538 = vsel %vm536, %v531, 0
        %v541 = vsel %vm536, %v535, 0
        %543 = vmatprep.subr.bf16.mxu0 0
        %544 = vmatpush1.bf16.xpose.msra.mxu0 %v541
        %545 = vmatprep.subr.bf16.mxu0 0
        %546 = vmatpush1.bf16.xpose.msra.mxu0 0
        %547 = vmatprep.subr.bf16.mxu0 0
        %548 = vmatpush1.bf16.xpose.msra.mxu0 0
        %549 = vmatprep.subr.bf16.mxu0 0
        %550 = vmatpush1.bf16.xpose.msra.mxu0 0
        %551 = vmatprep.subr.bf16.mxu0 0
        %552 = vmatpush1.bf16.xpose.msra.mxu0 0
        %553 = vmatprep.subr.bf16.mxu0 0
        %554 = vmatpush1.bf16.xpose.msra.mxu0 0
        %555 = vmatprep.subr.bf16.mxu0 0
        %556 = vmatpush1.bf16.xpose.msra.mxu0 0
        %557 = vmatprep.subr.bf16.mxu0 0
        %558 = vmatpush1.bf16.xpose.msra.mxu0 0
        %559 = vmatprep.subr.bf16.mxu0 0
        %560 = vmatpush1.bf16.xpose.msra.mxu0 0
        %561 = vmatprep.subr.bf16.mxu0 0
        %562 = vmatpush1.bf16.xpose.msra.mxu0 0
        %563 = vmatprep.subr.bf16.mxu0 0
        %564 = vmatpush1.bf16.xpose.msra.mxu0 0
        %565 = vmatprep.subr.bf16.mxu0 0
        %566 = vmatpush1.bf16.xpose.msra.mxu0 0
        %567 = vmatprep.subr.bf16.mxu0 0
        %568 = vmatpush1.bf16.xpose.msra.mxu0 0
        %569 = vmatprep.subr.bf16.mxu0 0
        %570 = vmatpush1.bf16.xpose.msra.mxu0 0
        %571 = vmatprep.subr.bf16.mxu0 0
        %572 = vmatpush1.bf16.xpose.msra.mxu0 0
        %573 = vmatprep.subr.bf16.mxu0 0
        %574 = vmatpush1.bf16.xpose.msra.mxu0 0
        %575 = vmatprep.mubr.bf16.mxu0 0
        %576 = vmatmul.mubr.bf16.gmra.mrb[0].mxu0 %v538
        %v577 = vpop.f32.mrb[0].mxu0
        %v578 = vadd.f32 0.0, %v577
        %v579 = vpop.f32.mrb[0].mxu0
        %v580 = vpop.f32.mrb[0].mxu0
        %v581 = vpop.f32.mrb[0].mxu0
        %582 = vdwg.mxu0
        %v583 = vsel %vm536, %v578, -inf
        %584 = vmax.xlane.f32.xlu0 %v583
        %v585 = vpop.xlane.xlu0 %584
        %v586 = vsub.f32 %v578, %v585
        %v587 = vmul.f32 %v586, 1.442695
        %v588 = vpow.pop %v587
        %v589 = vsel %vm536, %v588, 0.0
        %590 = vadd.xlane.f32.xlu0 %v589
        %v591 = vpop.xlane.xlu0 %590
        %v592 = vrcp.pop %v591
        %v593 = vmul.f32 %v588, %v592
        %v594 = vpack.c.bf16 %v593, %v593
        %595 = vrot.lane.b32.xlu0 %v532, 64
        %v596 = vpop.permute.xlu0 %595
        %v598 = vsel %vm536, %v594, 0
        %vm600 = vcmask 1043456
        %v602 = vsel %vm600, %v596, 0
        %604 = vmatprep.subr.bf16.mxu0 0
        %605 = vmatpush1.bf16.msra.mxu0 %v602
        %606 = vmatprep.subr.bf16.mxu0 0
        %607 = vmatpush1.bf16.msra.mxu0 0
        %608 = vmatprep.subr.bf16.mxu0 0
        %609 = vmatpush1.bf16.msra.mxu0 0
        %610 = vmatprep.subr.bf16.mxu0 0
        %611 = vmatpush1.bf16.msra.mxu0 0
        %612 = vmatprep.subr.bf16.mxu0 0
        %613 = vmatpush1.bf16.msra.mxu0 0
        %614 = vmatprep.subr.bf16.mxu0 0
        %615 = vmatpush1.bf16.msra.mxu0 0
        %616 = vmatprep.subr.bf16.mxu0 0
        %617 = vmatpush1.bf16.msra.mxu0 0
        %618 = vmatprep.subr.bf16.mxu0 0
        %619 = vmatpush1.bf16.msra.mxu0 0
        %620 = vmatprep.subr.bf16.mxu0 0
        %621 = vmatpush1.bf16.msra.mxu0 0
        %622 = vmatprep.subr.bf16.mxu0 0
        %623 = vmatpush1.bf16.msra.mxu0 0
        %624 = vmatprep.subr.bf16.mxu0 0
        %625 = vmatpush1.bf16.msra.mxu0 0
        %626 = vmatprep.subr.bf16.mxu0 0
        %627 = vmatpush1.bf16.msra.mxu0 0
        %628 = vmatprep.subr.bf16.mxu0 0
        %629 = vmatpush1.bf16.msra.mxu0 0
        %630 = vmatprep.subr.bf16.mxu0 0
        %631 = vmatpush1.bf16.msra.mxu0 0
        %632 = vmatprep.subr.bf16.mxu0 0
        %633 = vmatpush1.bf16.msra.mxu0 0
        %634 = vmatprep.subr.bf16.mxu0 0
        %635 = vmatpush1.bf16.msra.mxu0 0
        %636 = vmatprep.mubr.bf16.mxu0 0
        %637 = vmatmul.mubr.bf16.gmra.mrb[0].mxu0 %v598
        %v638 = vpop.f32.mrb[0].mxu0
        %v639 = vadd.f32 0.0, %v638
        %v640 = vpop.f32.mrb[0].mxu0
        %v641 = vpop.f32.mrb[0].mxu0
        %v642 = vpop.f32.mrb[0].mxu0
        %643 = vdwg.mxu0
        %645 = vrot.lane.b32.xlu0 %v531, 120
        %v646 = vpop.permute.xlu0 %645
        %647 = vrot.lane.b32.xlu0 %v532, 88
        %v648 = vpop.permute.xlu0 %647
        %v650 = vsel %vm536, %v646, 0
        %v653 = vsel %vm536, %v648, 0
        %655 = vmatprep.subr.bf16.mxu0 0
        %656 = vmatpush1.bf16.xpose.msra.mxu0 %v653
        %657 = vmatprep.subr.bf16.mxu0 0
        %658 = vmatpush1.bf16.xpose.msra.mxu0 0
        %659 = vmatprep.subr.bf16.mxu0 0
        %660 = vmatpush1.bf16.xpose.msra.mxu0 0
        %661 = vmatprep.subr.bf16.mxu0 0
        %662 = vmatpush1.bf16.xpose.msra.mxu0 0
        %663 = vmatprep.subr.bf16.mxu0 0
        %664 = vmatpush1.bf16.xpose.msra.mxu0 0
        %665 = vmatprep.subr.bf16.mxu0 0
        %666 = vmatpush1.bf16.xpose.msra.mxu0 0
        %667 = vmatprep.subr.bf16.mxu0 0
        %668 = vmatpush1.bf16.xpose.msra.mxu0 0
        %669 = vmatprep.subr.bf16.mxu0 0
        %670 = vmatpush1.bf16.xpose.msra.mxu0 0
        %671 = vmatprep.subr.bf16.mxu0 0
        %672 = vmatpush1.bf16.xpose.msra.mxu0 0
        %673 = vmatprep.subr.bf16.mxu0 0
        %674 = vmatpush1.bf16.xpose.msra.mxu0 0
        %675 = vmatprep.subr.bf16.mxu0 0
        %676 = vmatpush1.bf16.xpose.msra.mxu0 0
        %677 = vmatprep.subr.bf16.mxu0 0
        %678 = vmatpush1.bf16.xpose.msra.mxu0 0
        %679 = vmatprep.subr.bf16.mxu0 0
        %680 = vmatpush1.bf16.xpose.msra.mxu0 0
        %681 = vmatprep.subr.bf16.mxu0 0
        %682 = vmatpush1.bf16.xpose.msra.mxu0 0
        %683 = vmatprep.subr.bf16.mxu0 0
        %684 = vmatpush1.bf16.xpose.msra.mxu0 0
        %685 = vmatprep.subr.bf16.mxu0 0
        %686 = vmatpush1.bf16.xpose.msra.mxu0 0
        %687 = vmatprep.mubr.bf16.mxu0 0
        %688 = vmatmul.mubr.bf16.gmra.mrb[0].mxu0 %v650
        %v689 = vpop.f32.mrb[0].mxu0
        %v690 = vadd.f32 0.0, %v689
        %v691 = vpop.f32.mrb[0].mxu0
        %v692 = vpop.f32.mrb[0].mxu0
        %v693 = vpop.f32.mrb[0].mxu0
        %694 = vdwg.mxu0
        %v695 = vsel %vm536, %v690, -inf
        %696 = vmax.xlane.f32.xlu0 %v695
        %v697 = vpop.xlane.xlu0 %696
        %v698 = vsub.f32 %v690, %v697
        %v699 = vmul.f32 %v698, 1.442695
        %v700 = vpow.pop %v699
        %v701 = vsel %vm536, %v700, 0.0
        %702 = vadd.xlane.f32.xlu0 %v701
        %v703 = vpop.xlane.xlu0 %702
        %v704 = vrcp.pop %v703
        %v705 = vmul.f32 %v700, %v704
        %v706 = vpack.c.bf16 %v705, %v705
        %707 = vrot.lane.b32.xlu0 %v532, 56
        %v708 = vpop.permute.xlu0 %707
        %v710 = vsel %vm536, %v706, 0
        %v713 = vsel %vm600, %v708, 0
        %715 = vmatprep.subr.bf16.mxu0 0
        %716 = vmatpush1.bf16.msra.mxu0 %v713
        %717 = vmatprep.subr.bf16.mxu0 0
        %718 = vmatpush1.bf16.msra.mxu0 0
        %719 = vmatprep.subr.bf16.mxu0 0
        %720 = vmatpush1.bf16.msra.mxu0 0
        %721 = vmatprep.subr.bf16.mxu0 0
        %722 = vmatpush1.bf16.msra.mxu0 0
        %723 = vmatprep.subr.bf16.mxu0 0
        %724 = vmatpush1.bf16.msra.mxu0 0
        %725 = vmatprep.subr.bf16.mxu0 0
        %726 = vmatpush1.bf16.msra.mxu0 0
        %727 = vmatprep.subr.bf16.mxu0 0
        %728 = vmatpush1.bf16.msra.mxu0 0
        %729 = vmatprep.subr.bf16.mxu0 0
        %730 = vmatpush1.bf16.msra.mxu0 0
        %731 = vmatprep.subr.bf16.mxu0 0
        %732 = vmatpush1.bf16.msra.mxu0 0
        %733 = vmatprep.subr.bf16.mxu0 0
        %734 = vmatpush1.bf16.msra.mxu0 0
        %735 = vmatprep.subr.bf16.mxu0 0
        %736 = vmatpush1.bf16.msra.mxu0 0
        %737 = vmatprep.subr.bf16.mxu0 0
        %738 = vmatpush1.bf16.msra.mxu0 0
        %739 = vmatprep.subr.bf16.mxu0 0
        %740 = vmatpush1.bf16.msra.mxu0 0
        %741 = vmatprep.subr.bf16.mxu0 0
        %742 = vmatpush1.bf16.msra.mxu0 0
        %743 = vmatprep.subr.bf16.mxu0 0
        %744 = vmatpush1.bf16.msra.mxu0 0
        %745 = vmatprep.subr.bf16.mxu0 0
        %746 = vmatpush1.bf16.msra.mxu0 0
        %747 = vmatprep.mubr.bf16.mxu0 0
        %748 = vmatmul.mubr.bf16.gmra.mrb[0].mxu0 %v710
        %v749 = vpop.f32.mrb[0].mxu0
        %v750 = vadd.f32 0.0, %v749
        %v751 = vpop.f32.mrb[0].mxu0
        %v752 = vpop.f32.mrb[0].mxu0
        %v753 = vpop.f32.mrb[0].mxu0
        %754 = vdwg.mxu0
        %755 = vrot.lane.b32.xlu0 %v531, 112
        %v756 = vpop.permute.xlu0 %755
        %757 = vrot.lane.b32.xlu0 %v532, 80
        %v758 = vpop.permute.xlu0 %757
        %v760 = vsel %vm536, %v756, 0
        %v763 = vsel %vm536, %v758, 0
        %765 = vmatprep.subr.bf16.mxu0 0
        %766 = vmatpush1.bf16.xpose.msra.mxu0 %v763
        %767 = vmatprep.subr.bf16.mxu0 0
        %768 = vmatpush1.bf16.xpose.msra.mxu0 0
        %769 = vmatprep.subr.bf16.mxu0 0
        %770 = vmatpush1.bf16.xpose.msra.mxu0 0
        %771 = vmatprep.subr.bf16.mxu0 0
        %772 = vmatpush1.bf16.xpose.msra.mxu0 0
        %773 = vmatprep.subr.bf16.mxu0 0
        %774 = vmatpush1.bf16.xpose.msra.mxu0 0
        %775 = vmatprep.subr.bf16.mxu0 0
        %776 = vmatpush1.bf16.xpose.msra.mxu0 0
        %777 = vmatprep.subr.bf16.mxu0 0
        %778 = vmatpush1.bf16.xpose.msra.mxu0 0
        %779 = vmatprep.subr.bf16.mxu0 0
        %780 = vmatpush1.bf16.xpose.msra.mxu0 0
        %781 = vmatprep.subr.bf16.mxu0 0
        %782 = vmatpush1.bf16.xpose.msra.mxu0 0
        %783 = vmatprep.subr.bf16.mxu0 0
        %784 = vmatpush1.bf16.xpose.msra.mxu0 0
        %785 = vmatprep.subr.bf16.mxu0 0
        %786 = vmatpush1.bf16.xpose.msra.mxu0 0
        %787 = vmatprep.subr.bf16.mxu0 0
        %788 = vmatpush1.bf16.xpose.msra.mxu0 0
        %789 = vmatprep.subr.bf16.mxu0 0
        %790 = vmatpush1.bf16.xpose.msra.mxu0 0
        %791 = vmatprep.subr.bf16.mxu0 0
        %792 = vmatpush1.bf16.xpose.msra.mxu0 0
        %793 = vmatprep.subr.bf16.mxu0 0
        %794 = vmatpush1.bf16.xpose.msra.mxu0 0
        %795 = vmatprep.subr.bf16.mxu0 0
        %796 = vmatpush1.bf16.xpose.msra.mxu0 0
        %797 = vmatprep.mubr.bf16.mxu0 0
        %798 = vmatmul.mubr.bf16.gmra.mrb[0].mxu0 %v760
        %v799 = vpop.f32.mrb[0].mxu0
        %v800 = vadd.f32 0.0, %v799
        %v801 = vpop.f32.mrb[0].mxu0
        %v802 = vpop.f32.mrb[0].mxu0
        %v803 = vpop.f32.mrb[0].mxu0
        %804 = vdwg.mxu0
        %v805 = vsel %vm536, %v800, -inf
        %806 = vmax.xlane.f32.xlu0 %v805
        %v807 = vpop.xlane.xlu0 %806
        %v808 = vsub.f32 %v800, %v807
        %v809 = vmul.f32 %v808, 1.442695
        %v810 = vpow.pop %v809
        %v811 = vsel %vm536, %v810, 0.0
        %812 = vadd.xlane.f32.xlu0 %v811
        %v813 = vpop.xlane.xlu0 %812
        %v814 = vrcp.pop %v813
        %v815 = vmul.f32 %v810, %v814
        %v816 = vpack.c.bf16 %v815, %v815
        %817 = vrot.lane.b32.xlu0 %v532, 48
        %v818 = vpop.permute.xlu0 %817
        %v820 = vsel %vm536, %v816, 0
        %v823 = vsel %vm600, %v818, 0
        %825 = vmatprep.subr.bf16.mxu0 0
        %826 = vmatpush1.bf16.msra.mxu0 %v823
        %827 = vmatprep.subr.bf16.mxu0 0
        %828 = vmatpush1.bf16.msra.mxu0 0
        %829 = vmatprep.subr.bf16.mxu0 0
        %830 = vmatpush1.bf16.msra.mxu0 0
        %831 = vmatprep.subr.bf16.mxu0 0
        %832 = vmatpush1.bf16.msra.mxu0 0
        %833 = vmatprep.subr.bf16.mxu0 0
        %834 = vmatpush1.bf16.msra.mxu0 0
        %835 = vmatprep.subr.bf16.mxu0 0
        %836 = vmatpush1.bf16.msra.mxu0 0
        %837 = vmatprep.subr.bf16.mxu0 0
        %838 = vmatpush1.bf16.msra.mxu0 0
        %839 = vmatprep.subr.bf16.mxu0 0
        %840 = vmatpush1.bf16.msra.mxu0 0
        %841 = vmatprep.subr.bf16.mxu0 0
        %842 = vmatpush1.bf16.msra.mxu0 0
        %843 = vmatprep.subr.bf16.mxu0 0
        %844 = vmatpush1.bf16.msra.mxu0 0
        %845 = vmatprep.subr.bf16.mxu0 0
        %846 = vmatpush1.bf16.msra.mxu0 0
        %847 = vmatprep.subr.bf16.mxu0 0
        %848 = vmatpush1.bf16.msra.mxu0 0
        %849 = vmatprep.subr.bf16.mxu0 0
        %850 = vmatpush1.bf16.msra.mxu0 0
        %851 = vmatprep.subr.bf16.mxu0 0
        %852 = vmatpush1.bf16.msra.mxu0 0
        %853 = vmatprep.subr.bf16.mxu0 0
        %854 = vmatpush1.bf16.msra.mxu0 0
        %855 = vmatprep.subr.bf16.mxu0 0
        %856 = vmatpush1.bf16.msra.mxu0 0
        %857 = vmatprep.mubr.bf16.mxu0 0
        %858 = vmatmul.mubr.bf16.gmra.mrb[0].mxu0 %v820
        %v859 = vpop.f32.mrb[0].mxu0
        %v860 = vadd.f32 0.0, %v859
        %v861 = vpop.f32.mrb[0].mxu0
        %v862 = vpop.f32.mrb[0].mxu0
        %v863 = vpop.f32.mrb[0].mxu0
        %864 = vdwg.mxu0
        %865 = vrot.lane.b32.xlu0 %v531, 104
        %v866 = vpop.permute.xlu0 %865
        %867 = vrot.lane.b32.xlu0 %v532, 72
        %v868 = vpop.permute.xlu0 %867
        %v870 = vsel %vm536, %v866, 0
        %v873 = vsel %vm536, %v868, 0
        %875 = vmatprep.subr.bf16.mxu0 0
        %876 = vmatpush1.bf16.xpose.msra.mxu0 %v873
        %877 = vmatprep.subr.bf16.mxu0 0
        %878 = vmatpush1.bf16.xpose.msra.mxu0 0
        %879 = vmatprep.subr.bf16.mxu0 0
        %880 = vmatpush1.bf16.xpose.msra.mxu0 0
        %881 = vmatprep.subr.bf16.mxu0 0
        %882 = vmatpush1.bf16.xpose.msra.mxu0 0
        %883 = vmatprep.subr.bf16.mxu0 0
        %884 = vmatpush1.bf16.xpose.msra.mxu0 0
        %885 = vmatprep.subr.bf16.mxu0 0
        %886 = vmatpush1.bf16.xpose.msra.mxu0 0
        %887 = vmatprep.subr.bf16.mxu0 0
        %888 = vmatpush1.bf16.xpose.msra.mxu0 0
        %889 = vmatprep.subr.bf16.mxu0 0
        %890 = vmatpush1.bf16.xpose.msra.mxu0 0
        %891 = vmatprep.subr.bf16.mxu0 0
        %892 = vmatpush1.bf16.xpose.msra.mxu0 0
        %893 = vmatprep.subr.bf16.mxu0 0
        %894 = vmatpush1.bf16.xpose.msra.mxu0 0
        %895 = vmatprep.subr.bf16.mxu0 0
        %896 = vmatpush1.bf16.xpose.msra.mxu0 0
        %897 = vmatprep.subr.bf16.mxu0 0
        %898 = vmatpush1.bf16.xpose.msra.mxu0 0
        %899 = vmatprep.subr.bf16.mxu0 0
        %900 = vmatpush1.bf16.xpose.msra.mxu0 0
        %901 = vmatprep.subr.bf16.mxu0 0
        %902 = vmatpush1.bf16.xpose.msra.mxu0 0
        %903 = vmatprep.subr.bf16.mxu0 0
        %904 = vmatpush1.bf16.xpose.msra.mxu0 0
        %905 = vmatprep.subr.bf16.mxu0 0
        %906 = vmatpush1.bf16.xpose.msra.mxu0 0
        %907 = vmatprep.mubr.bf16.mxu0 0
        %908 = vmatmul.mubr.bf16.gmra.mrb[0].mxu0 %v870
        %v909 = vpop.f32.mrb[0].mxu0
        %v910 = vadd.f32 0.0, %v909
        %v911 = vpop.f32.mrb[0].mxu0
        %v912 = vpop.f32.mrb[0].mxu0
        %v913 = vpop.f32.mrb[0].mxu0
        %914 = vdwg.mxu0
        %v915 = vsel %vm536, %v910, -inf
        %916 = vmax.xlane.f32.xlu0 %v915
        %v917 = vpop.xlane.xlu0 %916
        %v918 = vsub.f32 %v910, %v917
        %v919 = vmul.f32 %v918, 1.442695
        %v920 = vpow.pop %v919
        %v921 = vsel %vm536, %v920, 0.0
        %922 = vadd.xlane.f32.xlu0 %v921
        %v923 = vpop.xlane.xlu0 %922
        %v924 = vrcp.pop %v923
        %v925 = vmul.f32 %v920, %v924
        %v926 = vpack.c.bf16 %v925, %v925
        %927 = vrot.lane.b32.xlu0 %v532, 40
        %v928 = vpop.permute.xlu0 %927
        %v930 = vsel %vm536, %v926, 0
        %v933 = vsel %vm600, %v928, 0
        %935 = vmatprep.subr.bf16.mxu0 0
        %936 = vmatpush1.bf16.msra.mxu0 %v933
        %937 = vmatprep.subr.bf16.mxu0 0
        %938 = vmatpush1.bf16.msra.mxu0 0
        %939 = vmatprep.subr.bf16.mxu0 0
        %940 = vmatpush1.bf16.msra.mxu0 0
        %941 = vmatprep.subr.bf16.mxu0 0
        %942 = vmatpush1.bf16.msra.mxu0 0
        %943 = vmatprep.subr.bf16.mxu0 0
        %944 = vmatpush1.bf16.msra.mxu0 0
        %945 = vmatprep.subr.bf16.mxu0 0
        %946 = vmatpush1.bf16.msra.mxu0 0
        %947 = vmatprep.subr.bf16.mxu0 0
        %948 = vmatpush1.bf16.msra.mxu0 0
        %949 = vmatprep.subr.bf16.mxu0 0
        %950 = vmatpush1.bf16.msra.mxu0 0
        %951 = vmatprep.subr.bf16.mxu0 0
        %952 = vmatpush1.bf16.msra.mxu0 0
        %953 = vmatprep.subr.bf16.mxu0 0
        %954 = vmatpush1.bf16.msra.mxu0 0
        %955 = vmatprep.subr.bf16.mxu0 0
        %956 = vmatpush1.bf16.msra.mxu0 0
        %957 = vmatprep.subr.bf16.mxu0 0
        %958 = vmatpush1.bf16.msra.mxu0 0
        %959 = vmatprep.subr.bf16.mxu0 0
        %960 = vmatpush1.bf16.msra.mxu0 0
        %961 = vmatprep.subr.bf16.mxu0 0
        %962 = vmatpush1.bf16.msra.mxu0 0
        %963 = vmatprep.subr.bf16.mxu0 0
        %964 = vmatpush1.bf16.msra.mxu0 0
        %965 = vmatprep.subr.bf16.mxu0 0
        %966 = vmatpush1.bf16.msra.mxu0 0
        %967 = vmatprep.mubr.bf16.mxu0 0
        %968 = vmatmul.mubr.bf16.gmra.mrb[0].mxu0 %v930
        %v969 = vpop.f32.mrb[0].mxu0
        %v970 = vadd.f32 0.0, %v969
        %v971 = vpop.f32.mrb[0].mxu0
        %v972 = vpop.f32.mrb[0].mxu0
        %v973 = vpop.f32.mrb[0].mxu0
        %974 = vdwg.mxu0
        %976 = vrot.lane.b32.xlu0 %v750, 8
        %v977 = vpop.permute.xlu0 %976
        %980 = vrot.lane.b32.xlu0 %v860, 16
        %v981 = vpop.permute.xlu0 %980
        %984 = vrot.lane.b32.xlu0 %v970, 24
        %v985 = vpop.permute.xlu0 %984
        %v987 = vsel %vm536, %v639, %v977
        %vm988 = vcmask 130048
        %v989 = vsel %vm988, %v987, %v981
        %vm990 = vcmask 195584
        %v991 = vsel %vm990, %v989, %v985
        %v992 = vpack.c.bf16 %v991, %v991
        %v993 = vld [vmem:[%s4] sm:$0xf]
        %v994 = vld [vmem:[%s4 + $0x4] sm:$0xf]
        %v995 = vld [vmem:[%s4 + $0x8] sm:$0xf]
        %v996 = vld [vmem:[%s4 + $0xc] sm:$0xf]
        %v997 = vlaneseq
        %v998 = vshrl.u32 %v997, 7
        %v999 = vsub.s32 1, %v998
        %v1000 = vrot.slane %v464, %v999
        %v1005 = vunpack.c.l.b16 %v993
        %v1006 = vunpack.c.l.b16 %v994
        %v1007 = vunpack.c.l.b16 %v995
        %v1008 = vunpack.c.l.b16 %v996
        %v1009 = vpack.c.b16 %v1006, %v1005
        %v1010 = vpack.c.b16 %v1008, %v1007
        %v1014 = vsel %vm486, %v992, 0
        %1016 = vmatprep.subr.bf16.mxu0 0
        %1017 = vmatpush1.bf16.msra.mxu0 %v1009
        %1018 = vmatprep.subr.bf16.mxu0 0
        %1019 = vmatpush1.bf16.msra.mxu0 %v1010
        %1020 = vmatprep.subr.bf16.mxu0 0
        %1021 = vmatpush1.bf16.msra.mxu0 0
        %1022 = vmatprep.subr.bf16.mxu0 0
        %1023 = vmatpush1.bf16.msra.mxu0 0
        %1024 = vmatprep.subr.bf16.mxu0 0
        %1025 = vmatpush1.bf16.msra.mxu0 0
        %1026 = vmatprep.subr.bf16.mxu0 0
        %1027 = vmatpush1.bf16.msra.mxu0 0
        %1028 = vmatprep.subr.bf16.mxu0 0
        %1029 = vmatpush1.bf16.msra.mxu0 0
        %1030 = vmatprep.subr.bf16.mxu0 0
        %1031 = vmatpush1.bf16.msra.mxu0 0
        %1032 = vmatprep.subr.bf16.mxu0 0
        %1033 = vmatpush1.bf16.msra.mxu0 0
        %1034 = vmatprep.subr.bf16.mxu0 0
        %1035 = vmatpush1.bf16.msra.mxu0 0
        %1036 = vmatprep.subr.bf16.mxu0 0
        %1037 = vmatpush1.bf16.msra.mxu0 0
        %1038 = vmatprep.subr.bf16.mxu0 0
        %1039 = vmatpush1.bf16.msra.mxu0 0
        %1040 = vmatprep.subr.bf16.mxu0 0
        %1041 = vmatpush1.bf16.msra.mxu0 0
        %1042 = vmatprep.subr.bf16.mxu0 0
        %1043 = vmatpush1.bf16.msra.mxu0 0
        %1044 = vmatprep.subr.bf16.mxu0 0
        %1045 = vmatpush1.bf16.msra.mxu0 0
        %1046 = vmatprep.subr.bf16.mxu0 0
        %1047 = vmatpush1.bf16.msra.mxu0 0
        %1048 = vmatprep.mubr.bf16.mxu0 0
        %1049 = vmatmul.mubr.bf16.gmra.mrb[0].mxu0 %v1014
        %v1050 = vpop.f32.mrb[0].mxu0
        %v1051 = vadd.f32 %v1000, %v1050
        %v1052 = vpop.f32.mrb[0].mxu0
        %v1053 = vpop.f32.mrb[0].mxu0
        %v1054 = vpop.f32.mrb[0].mxu0
        %1055 = vdwg.mxu0
        %v1056 = vadd.f32 %v461, %v1051
        %v1057 = vsel %vm486, %v1056, 0.0
        %1058 = vadd.xlane.f32.xlu0 %v1057
        %v1059 = vpop.xlane.xlu0 %1058
        %v1060 = vrcp.pop 32.0
        %v1061 = vmul.f32 %v1059, %v1060
        %v1062 = vsub.f32 %v1056, %v1061
        %v1063 = vmul.f32 %v1062, %v1062
        %v1064 = vsel %vm486, %v1063, 0.0
        %1065 = vadd.xlane.f32.xlu0 %v1064
        %v1066 = vpop.xlane.xlu0 %1065
        %v1067 = vmul.f32 %v1066, %v1060
        %v1068 = vadd.f32 %v1067, 1e-05
        %v1069 = vrsqrt.pop %v1068
        %v1070 = vmul.f32 %v1062, %v1069
        %v1071 = vlaneseq
        %v1072 = vshrl.u32 %v1071, 7
        %v1073 = vsub.s32 4, %v1072
        %v1074 = vrot.slane %v464, %v1073
        %v1075 = vmul.f32 %v1070, %v1074
        %v1076 = vlaneseq
        %v1077 = vshrl.u32 %v1076, 7
        %v1078 = vsub.s32 5, %v1077
        %v1079 = vrot.slane %v464, %v1078
        %v1080 = vadd.f32 %v1075, %v1079
        %v1081 = vpack.c.bf16 %v1080, %v1080
        %v1082 = vld [vmem:[%s5] sm:$0xf]
        %v1083 = vld [vmem:[%s5 + $0x4] sm:$0xf]
        %v1084 = vld [vmem:[%s5 + $0x8] sm:$0xf]
        %v1085 = vld [vmem:[%s5 + $0xc] sm:$0xf]
        %v1086 = vlaneseq
        %v1087 = vshrl.u32 %v1086, 7
        %v1088 = vsub.s32 2, %v1087
        %v1089 = vrot.slane %v464, %v1088
        %v1094 = vunpack.c.l.b16 %v1082
        %v1095 = vunpack.c.l.b16 %v1083
        %v1096 = vunpack.c.l.b16 %v1084
        %v1097 = vunpack.c.l.b16 %v1085
        %v1098 = vpack.c.b16 %v1095, %v1094
        %v1099 = vpack.c.b16 %v1097, %v1096
        %v1103 = vsel %vm486, %v1081, 0
        %1105 = vmatprep.subr.bf16.mxu0 0
        %1106 = vmatpush1.bf16.msra.mxu0 %v1098
        %1107 = vmatprep.subr.bf16.mxu0 0
        %1108 = vmatpush1.bf16.msra.mxu0 %v1099
        %1109 = vmatprep.subr.bf16.mxu0 0
        %1110 = vmatpush1.bf16.msra.mxu0 0
        %1111 = vmatprep.subr.bf16.mxu0 0
        %1112 = vmatpush1.bf16.msra.mxu0 0
        %1113 = vmatprep.subr.bf16.mxu0 0
        %1114 = vmatpush1.bf16.msra.mxu0 0
        %1115 = vmatprep.subr.bf16.mxu0 0
        %1116 = vmatpush1.bf16.msra.mxu0 0
        %1117 = vmatprep.subr.bf16.mxu0 0
        %1118 = vmatpush1.bf16.msra.mxu0 0
        %1119 = vmatprep.subr.bf16.mxu0 0
        %1120 = vmatpush1.bf16.msra.mxu0 0
        %1121 = vmatprep.subr.bf16.mxu0 0
        %1122 = vmatpush1.bf16.msra.mxu0 0
        %1123 = vmatprep.subr.bf16.mxu0 0
        %1124 = vmatpush1.bf16.msra.mxu0 0
        %1125 = vmatprep.subr.bf16.mxu0 0
        %1126 = vmatpush1.bf16.msra.mxu0 0
        %1127 = vmatprep.subr.bf16.mxu0 0
        %1128 = vmatpush1.bf16.msra.mxu0 0
        %1129 = vmatprep.subr.bf16.mxu0 0
        %1130 = vmatpush1.bf16.msra.mxu0 0
        %1131 = vmatprep.subr.bf16.mxu0 0
        %1132 = vmatpush1.bf16.msra.mxu0 0
        %1133 = vmatprep.subr.bf16.mxu0 0
        %1134 = vmatpush1.bf16.msra.mxu0 0
        %1135 = vmatprep.subr.bf16.mxu0 0
        %1136 = vmatpush1.bf16.msra.mxu0 0
        %1137 = vmatprep.mubr.bf16.mxu0 0
        %1138 = vmatmul.mubr.bf16.gmra.mrb[0].mxu0 %v1103
        %v1139 = vpop.f32.mrb[0].mxu0
        %v1140 = vadd.f32 %v1089, %v1139
        %v1141 = vpop.f32.mrb[0].mxu0
        %v1142 = vpop.f32.mrb[0].mxu0
        %v1143 = vpop.f32.mrb[0].mxu0
        %1144 = vdwg.mxu0
        %v1145 = vmax.f32 %v1140, 0.0
        %v1146 = vpack.c.bf16 %v1145, %v1145
        %v1147 = vld [vmem:[%s6] sm:$0xf]
        %v1148 = vld [vmem:[%s6 + $0x4] sm:$0xf]
        %v1149 = vld [vmem:[%s6 + $0x8] sm:$0xf]
        %v1150 = vld [vmem:[%s6 + $0xc] sm:$0xf]
        %v1151 = vld [vmem:[%s6 + $0x10] sm:$0xf]
        %v1152 = vld [vmem:[%s6 + $0x14] sm:$0xf]
        %v1153 = vld [vmem:[%s6 + $0x18] sm:$0xf]
        %v1154 = vld [vmem:[%s6 + $0x1c] sm:$0xf]
        %v1155 = vlaneseq
        %v1156 = vshrl.u32 %v1155, 7
        %v1157 = vsub.s32 3, %v1156
        %v1158 = vrot.slane %v464, %v1157
        %v1167 = vunpack.c.l.b16 %v1147
        %v1168 = vunpack.c.l.b16 %v1148
        %v1169 = vunpack.c.l.b16 %v1149
        %v1170 = vunpack.c.l.b16 %v1150
        %v1171 = vunpack.c.l.b16 %v1151
        %v1172 = vunpack.c.l.b16 %v1152
        %v1173 = vunpack.c.l.b16 %v1153
        %v1174 = vunpack.c.l.b16 %v1154
        %v1175 = vpack.c.b16 %v1168, %v1167
        %v1176 = vpack.c.b16 %v1170, %v1169
        %v1177 = vpack.c.b16 %v1172, %v1171
        %v1178 = vpack.c.b16 %v1174, %v1173
        %v1184 = vsel %vm390, %v1146, 0
        %1186 = vmatprep.subr.bf16.mxu0 0
        %1187 = vmatpush1.bf16.msra.mxu0 %v1175
        %1188 = vmatprep.subr.bf16.mxu0 0
        %1189 = vmatpush1.bf16.msra.mxu0 %v1176
        %1190 = vmatprep.subr.bf16.mxu0 0
        %1191 = vmatpush1.bf16.msra.mxu0 %v1177
        %1192 = vmatprep.subr.bf16.mxu0 0
        %1193 = vmatpush1.bf16.msra.mxu0 %v1178
        %1194 = vmatprep.subr.bf16.mxu0 0
        %1195 = vmatpush1.bf16.msra.mxu0 0
        %1196 = vmatprep.subr.bf16.mxu0 0
        %1197 = vmatpush1.bf16.msra.mxu0 0
        %1198 = vmatprep.subr.bf16.mxu0 0
        %1199 = vmatpush1.bf16.msra.mxu0 0
        %1200 = vmatprep.subr.bf16.mxu0 0
        %1201 = vmatpush1.bf16.msra.mxu0 0
        %1202 = vmatprep.subr.bf16.mxu0 0
        %1203 = vmatpush1.bf16.msra.mxu0 0
        %1204 = vmatprep.subr.bf16.mxu0 0
        %1205 = vmatpush1.bf16.msra.mxu0 0
        %1206 = vmatprep.subr.bf16.mxu0 0
        %1207 = vmatpush1.bf16.msra.mxu0 0
        %1208 = vmatprep.subr.bf16.mxu0 0
        %1209 = vmatpush1.bf16.msra.mxu0 0
        %1210 = vmatprep.subr.bf16.mxu0 0
        %1211 = vmatpush1.bf16.msra.mxu0 0
        %1212 = vmatprep.subr.bf16.mxu0 0
        %1213 = vmatpush1.bf16.msra.mxu0 0
        %1214 = vmatprep.subr.bf16.mxu0 0
        %1215 = vmatpush1.bf16.msra.mxu0 0
        %1216 = vmatprep.subr.bf16.mxu0 0
        %1217 = vmatpush1.bf16.msra.mxu0 0
        %1218 = vmatprep.mubr.bf16.mxu0 0
        %1219 = vmatmul.mubr.bf16.gmra.mrb[0].mxu0 %v1184
        %v1220 = vpop.f32.mrb[0].mxu0
        %v1221 = vadd.f32 %v1158, %v1220
        %v1222 = vpop.f32.mrb[0].mxu0
        %v1223 = vpop.f32.mrb[0].mxu0
        %v1224 = vpop.f32.mrb[0].mxu0
        %1225 = vdwg.mxu0
        %v1226 = vadd.f32 %v1080, %v1221
        %v1227 = vsel %vm486, %v1226, 0.0
        %1228 = vadd.xlane.f32.xlu0 %v1227
        %v1229 = vpop.xlane.xlu0 %1228
        %v1230 = vmul.f32 %v1229, %v1060
        %v1231 = vsub.f32 %v1226, %v1230
        %v1232 = vmul.f32 %v1231, %v1231
        %v1233 = vsel %vm486, %v1232, 0.0
        %1234 = vadd.xlane.f32.xlu0 %v1233
        %v1235 = vpop.xlane.xlu0 %1234
        %v1236 = vmul.f32 %v1235, %v1060
        %v1237 = vadd.f32 %v1236, 1e-05
        %v1238 = vrsqrt.pop %v1237
        %v1239 = vmul.f32 %v1231, %v1238
        %v1240 = vlaneseq
        %v1241 = vshrl.u32 %v1240, 7
        %v1242 = vsub.s32 6, %v1241
        %v1243 = vrot.slane %v464, %v1242
        %v1244 = vmul.f32 %v1239, %v1243
        %v1245 = vlaneseq
        %v1246 = vshrl.u32 %v1245, 7
        %v1247 = vsub.s32 7, %v1246
        %v1248 = vrot.slane %v464, %v1247
        %v1249 = vadd.f32 %v1244, %v1248
        %s1250 = scalar_lea.vmem %s7, 8
        %v1251 = vld [vmem:[%s1250] sm:$0xff]
        %v1252 = vpack.c.bf16 %v1249, %v1249
        %s1253 = scalar_lea.vmem %s3, 16
        %v1254 = vld [vmem:[%s1253] sm:$0xf]
        %v1255 = vld [vmem:[%s1253 + $0x4] sm:$0xf]
        %v1256 = vld [vmem:[%s1253 + $0x8] sm:$0xf]
        %v1257 = vld [vmem:[%s1253 + $0xc] sm:$0xf]
        %v1258 = vlaneseq
        %v1259 = vshrl.u32 %v1258, 7
        %v1260 = vsub.s32 0, %v1259
        %v1261 = vrot.slane %v1251, %v1260
        %v1266 = vunpack.c.l.b16 %v1254
        %v1267 = vunpack.c.l.b16 %v1255
        %v1268 = vunpack.c.l.b16 %v1256
        %v1269 = vunpack.c.l.b16 %v1257
        %v1270 = vpack.c.b16 %v1267, %v1266
        %v1271 = vpack.c.b16 %v1269, %v1268
        %v1275 = vsel %vm486, %v1252, 0
        %1277 = vmatprep.subr.bf16.mxu0 0
        %1278 = vmatpush1.bf16.msra.mxu0 %v1270
        %1279 = vmatprep.subr.bf16.mxu0 0
        %1280 = vmatpush1.bf16.msra.mxu0 %v1271
        %1281 = vmatprep.subr.bf16.mxu0 0
        %1282 = vmatpush1.bf16.msra.mxu0 0
        %1283 = vmatprep.subr.bf16.mxu0 0
        %1284 = vmatpush1.bf16.msra.mxu0 0
        %1285 = vmatprep.subr.bf16.mxu0 0
        %1286 = vmatpush1.bf16.msra.mxu0 0
        %1287 = vmatprep.subr.bf16.mxu0 0
        %1288 = vmatpush1.bf16.msra.mxu0 0
        %1289 = vmatprep.subr.bf16.mxu0 0
        %1290 = vmatpush1.bf16.msra.mxu0 0
        %1291 = vmatprep.subr.bf16.mxu0 0
        %1292 = vmatpush1.bf16.msra.mxu0 0
        %1293 = vmatprep.subr.bf16.mxu0 0
        %1294 = vmatpush1.bf16.msra.mxu0 0
        %1295 = vmatprep.subr.bf16.mxu0 0
        %1296 = vmatpush1.bf16.msra.mxu0 0
        %1297 = vmatprep.subr.bf16.mxu0 0
        %1298 = vmatpush1.bf16.msra.mxu0 0
        %1299 = vmatprep.subr.bf16.mxu0 0
        %1300 = vmatpush1.bf16.msra.mxu0 0
        %1301 = vmatprep.subr.bf16.mxu0 0
        %1302 = vmatpush1.bf16.msra.mxu0 0
        %1303 = vmatprep.subr.bf16.mxu0 0
        %1304 = vmatpush1.bf16.msra.mxu0 0
        %1305 = vmatprep.subr.bf16.mxu0 0
        %1306 = vmatpush1.bf16.msra.mxu0 0
        %1307 = vmatprep.subr.bf16.mxu0 0
        %1308 = vmatpush1.bf16.msra.mxu0 0
        %1309 = vmatprep.mubr.bf16.mxu0 0
        %1310 = vmatmul.mubr.bf16.gmra.mrb[0].mxu0 %v1275
        %v1311 = vpop.f32.mrb[0].mxu0
        %v1312 = vadd.f32 %v1261, %v1311
        %v1313 = vpop.f32.mrb[0].mxu0
        %v1314 = vpop.f32.mrb[0].mxu0
        %v1315 = vpop.f32.mrb[0].mxu0
        %1316 = vdwg.mxu0
        %v1317 = vmul.f32 %v1312, 0.35355338
        %v1318 = vpack.c.bf16 %v1317, %v1317
        %v1319 = vpack.c.bf16 %v1312, %v1312
        %1321 = vrot.lane.b32.xlu0 %v1319, 96
        %v1322 = vpop.permute.xlu0 %1321
        %v1324 = vsel %vm536, %v1318, 0
        %v1327 = vsel %vm536, %v1322, 0
        %1329 = vmatprep.subr.bf16.mxu0 0
        %1330 = vmatpush1.bf16.xpose.msra.mxu0 %v1327
        %1331 = vmatprep.subr.bf16.mxu0 0
        %1332 = vmatpush1.bf16.xpose.msra.mxu0 0
        %1333 = vmatprep.subr.bf16.mxu0 0
        %1334 = vmatpush1.bf16.xpose.msra.mxu0 0
        %1335 = vmatprep.subr.bf16.mxu0 0
        %1336 = vmatpush1.bf16.xpose.msra.mxu0 0
        %1337 = vmatprep.subr.bf16.mxu0 0
        %1338 = vmatpush1.bf16.xpose.msra.mxu0 0
        %1339 = vmatprep.subr.bf16.mxu0 0
        %1340 = vmatpush1.bf16.xpose.msra.mxu0 0
        %1341 = vmatprep.subr.bf16.mxu0 0
        %1342 = vmatpush1.bf16.xpose.msra.mxu0 0
        %1343 = vmatprep.subr.bf16.mxu0 0
        %1344 = vmatpush1.bf16.xpose.msra.mxu0 0
        %1345 = vmatprep.subr.bf16.mxu0 0
        %1346 = vmatpush1.bf16.xpose.msra.mxu0 0
        %1347 = vmatprep.subr.bf16.mxu0 0
        %1348 = vmatpush1.bf16.xpose.msra.mxu0 0
        %1349 = vmatprep.subr.bf16.mxu0 0
        %1350 = vmatpush1.bf16.xpose.msra.mxu0 0
        %1351 = vmatprep.subr.bf16.mxu0 0
        %1352 = vmatpush1.bf16.xpose.msra.mxu0 0
        %1353 = vmatprep.subr.bf16.mxu0 0
        %1354 = vmatpush1.bf16.xpose.msra.mxu0 0
        %1355 = vmatprep.subr.bf16.mxu0 0
        %1356 = vmatpush1.bf16.xpose.msra.mxu0 0
        %1357 = vmatprep.subr.bf16.mxu0 0
        %1358 = vmatpush1.bf16.xpose.msra.mxu0 0
        %1359 = vmatprep.subr.bf16.mxu0 0
        %1360 = vmatpush1.bf16.xpose.msra.mxu0 0
        %1361 = vmatprep.mubr.bf16.mxu0 0
        %1362 = vmatmul.mubr.bf16.gmra.mrb[0].mxu0 %v1324
        %v1363 = vpop.f32.mrb[0].mxu0
        %v1364 = vadd.f32 0.0, %v1363
        %v1365 = vpop.f32.mrb[0].mxu0
        %v1366 = vpop.f32.mrb[0].mxu0
        %v1367 = vpop.f32.mrb[0].mxu0
        %1368 = vdwg.mxu0
        %v1369 = vsel %vm536, %v1364, -inf
        %1370 = vmax.xlane.f32.xlu0 %v1369
        %v1371 = vpop.xlane.xlu0 %1370
        %v1372 = vsub.f32 %v1364, %v1371
        %v1373 = vmul.f32 %v1372, 1.442695
        %v1374 = vpow.pop %v1373
        %v1375 = vsel %vm536, %v1374, 0.0
        %1376 = vadd.xlane.f32.xlu0 %v1375
        %v1377 = vpop.xlane.xlu0 %1376
        %v1378 = vrcp.pop %v1377
        %v1379 = vmul.f32 %v1374, %v1378
        %v1380 = vpack.c.bf16 %v1379, %v1379
        %1381 = vrot.lane.b32.xlu0 %v1319, 64
        %v1382 = vpop.permute.xlu0 %1381
        %v1384 = vsel %vm536, %v1380, 0
        %v1387 = vsel %vm600, %v1382, 0
        %1389 = vmatprep.subr.bf16.mxu0 0
        %1390 = vmatpush1.bf16.msra.mxu0 %v1387
        %1391 = vmatprep.subr.bf16.mxu0 0
        %1392 = vmatpush1.bf16.msra.mxu0 0
        %1393 = vmatprep.subr.bf16.mxu0 0
        %1394 = vmatpush1.bf16.msra.mxu0 0
        %1395 = vmatprep.subr.bf16.mxu0 0
        %1396 = vmatpush1.bf16.msra.mxu0 0
        %1397 = vmatprep.subr.bf16.mxu0 0
        %1398 = vmatpush1.bf16.msra.mxu0 0
        %1399 = vmatprep.subr.bf16.mxu0 0
        %1400 = vmatpush1.bf16.msra.mxu0 0
        %1401 = vmatprep.subr.bf16.mxu0 0
        %1402 = vmatpush1.bf16.msra.mxu0 0
        %1403 = vmatprep.subr.bf16.mxu0 0
        %1404 = vmatpush1.bf16.msra.mxu0 0
        %1405 = vmatprep.subr.bf16.mxu0 0
        %1406 = vmatpush1.bf16.msra.mxu0 0
        %1407 = vmatprep.subr.bf16.mxu0 0
        %1408 = vmatpush1.bf16.msra.mxu0 0
        %1409 = vmatprep.subr.bf16.mxu0 0
        %1410 = vmatpush1.bf16.msra.mxu0 0
        %1411 = vmatprep.subr.bf16.mxu0 0
        %1412 = vmatpush1.bf16.msra.mxu0 0
        %1413 = vmatprep.subr.bf16.mxu0 0
        %1414 = vmatpush1.bf16.msra.mxu0 0
        %1415 = vmatprep.subr.bf16.mxu0 0
        %1416 = vmatpush1.bf16.msra.mxu0 0
        %1417 = vmatprep.subr.bf16.mxu0 0
        %1418 = vmatpush1.bf16.msra.mxu0 0
        %1419 = vmatprep.subr.bf16.mxu0 0
        %1420 = vmatpush1.bf16.msra.mxu0 0
        %1421 = vmatprep.mubr.bf16.mxu0 0
        %1422 = vmatmul.mubr.bf16.gmra.mrb[0].mxu0 %v1384
        %v1423 = vpop.f32.mrb[0].mxu0
        %v1424 = vadd.f32 0.0, %v1423
        %v1425 = vpop.f32.mrb[0].mxu0
        %v1426 = vpop.f32.mrb[0].mxu0
        %v1427 = vpop.f32.mrb[0].mxu0
        %1428 = vdwg.mxu0
        %1430 = vrot.lane.b32.xlu0 %v1318, 120
        %v1431 = vpop.permute.xlu0 %1430
        %1432 = vrot.lane.b32.xlu0 %v1319, 88
        %v1433 = vpop.permute.xlu0 %1432
        %v1435 = vsel %vm536, %v1431, 0
        %v1438 = vsel %vm536, %v1433, 0
        %1440 = vmatprep.subr.bf16.mxu0 0
        %1441 = vmatpush1.bf16.xpose.msra.mxu0 %v1438
        %1442 = vmatprep.subr.bf16.mxu0 0
        %1443 = vmatpush1.bf16.xpose.msra.mxu0 0
        %1444 = vmatprep.subr.bf16.mxu0 0
        %1445 = vmatpush1.bf16.xpose.msra.mxu0 0
        %1446 = vmatprep.subr.bf16.mxu0 0
        %1447 = vmatpush1.bf16.xpose.msra.mxu0 0
        %1448 = vmatprep.subr.bf16.mxu0 0
        %1449 = vmatpush1.bf16.xpose.msra.mxu0 0
        %1450 = vmatprep.subr.bf16.mxu0 0
        %1451 = vmatpush1.bf16.xpose.msra.mxu0 0
        %1452 = vmatprep.subr.bf16.mxu0 0
        %1453 = vmatpush1.bf16.xpose.msra.mxu0 0
        %1454 = vmatprep.subr.bf16.mxu0 0
        %1455 = vmatpush1.bf16.xpose.msra.mxu0 0
        %1456 = vmatprep.subr.bf16.mxu0 0
        %1457 = vmatpush1.bf16.xpose.msra.mxu0 0
        %1458 = vmatprep.subr.bf16.mxu0 0
        %1459 = vmatpush1.bf16.xpose.msra.mxu0 0
        %1460 = vmatprep.subr.bf16.mxu0 0
        %1461 = vmatpush1.bf16.xpose.msra.mxu0 0
        %1462 = vmatprep.subr.bf16.mxu0 0
        %1463 = vmatpush1.bf16.xpose.msra.mxu0 0
        %1464 = vmatprep.subr.bf16.mxu0 0
        %1465 = vmatpush1.bf16.xpose.msra.mxu0 0
        %1466 = vmatprep.subr.bf16.mxu0 0
        %1467 = vmatpush1.bf16.xpose.msra.mxu0 0
        %1468 = vmatprep.subr.bf16.mxu0 0
        %1469 = vmatpush1.bf16.xpose.msra.mxu0 0
        %1470 = vmatprep.subr.bf16.mxu0 0
        %1471 = vmatpush1.bf16.xpose.msra.mxu0 0
        %1472 = vmatprep.mubr.bf16.mxu0 0
        %1473 = vmatmul.mubr.bf16.gmra.mrb[0].mxu0 %v1435
        %v1474 = vpop.f32.mrb[0].mxu0
        %v1475 = vadd.f32 0.0, %v1474
        %v1476 = vpop.f32.mrb[0].mxu0
        %v1477 = vpop.f32.mrb[0].mxu0
        %v1478 = vpop.f32.mrb[0].mxu0
        %1479 = vdwg.mxu0
        %v1480 = vsel %vm536, %v1475, -inf
        %1481 = vmax.xlane.f32.xlu0 %v1480
        %v1482 = vpop.xlane.xlu0 %1481
        %v1483 = vsub.f32 %v1475, %v1482
        %v1484 = vmul.f32 %v1483, 1.442695
        %v1485 = vpow.pop %v1484
        %v1486 = vsel %vm536, %v1485, 0.0
        %1487 = vadd.xlane.f32.xlu0 %v1486
        %v1488 = vpop.xlane.xlu0 %1487
        %v1489 = vrcp.pop %v1488
        %v1490 = vmul.f32 %v1485, %v1489
        %v1491 = vpack.c.bf16 %v1490, %v1490
        %1492 = vrot.lane.b32.xlu0 %v1319, 56
        %v1493 = vpop.permute.xlu0 %1492
        %v1495 = vsel %vm536, %v1491, 0
        %v1498 = vsel %vm600, %v1493, 0
        %1500 = vmatprep.subr.bf16.mxu0 0
        %1501 = vmatpush1.bf16.msra.mxu0 %v1498
        %1502 = vmatprep.subr.bf16.mxu0 0
        %1503 = vmatpush1.bf16.msra.mxu0 0
        %1504 = vmatprep.subr.bf16.mxu0 0
        %1505 = vmatpush1.bf16.msra.mxu0 0
        %1506 = vmatprep.subr.bf16.mxu0 0
        %1507 = vmatpush1.bf16.msra.mxu0 0
        %1508 = vmatprep.subr.bf16.mxu0 0
        %1509 = vmatpush1.bf16.msra.mxu0 0
        %1510 = vmatprep.subr.bf16.mxu0 0
        %1511 = vmatpush1.bf16.msra.mxu0 0
        %1512 = vmatprep.subr.bf16.mxu0 0
        %1513 = vmatpush1.bf16.msra.mxu0 0
        %1514 = vmatprep.subr.bf16.mxu0 0
        %1515 = vmatpush1.bf16.msra.mxu0 0
        %1516 = vmatprep.subr.bf16.mxu0 0
        %1517 = vmatpush1.bf16.msra.mxu0 0
        %1518 = vmatprep.subr.bf16.mxu0 0
        %1519 = vmatpush1.bf16.msra.mxu0 0
        %1520 = vmatprep.subr.bf16.mxu0 0
        %1521 = vmatpush1.bf16.msra.mxu0 0
        %1522 = vmatprep.subr.bf16.mxu0 0
        %1523 = vmatpush1.bf16.msra.mxu0 0
        %1524 = vmatprep.subr.bf16.mxu0 0
        %1525 = vmatpush1.bf16.msra.mxu0 0
        %1526 = vmatprep.subr.bf16.mxu0 0
        %1527 = vmatpush1.bf16.msra.mxu0 0
        %1528 = vmatprep.subr.bf16.mxu0 0
        %1529 = vmatpush1.bf16.msra.mxu0 0
        %1530 = vmatprep.subr.bf16.mxu0 0
        %1531 = vmatpush1.bf16.msra.mxu0 0
        %1532 = vmatprep.mubr.bf16.mxu0 0
        %1533 = vmatmul.mubr.bf16.gmra.mrb[0].mxu0 %v1495
        %v1534 = vpop.f32.mrb[0].mxu0
        %v1535 = vadd.f32 0.0, %v1534
        %v1536 = vpop.f32.mrb[0].mxu0
        %v1537 = vpop.f32.mrb[0].mxu0
        %v1538 = vpop.f32.mrb[0].mxu0
        %1539 = vdwg.mxu0
        %1540 = vrot.lane.b32.xlu0 %v1318, 112
        %v1541 = vpop.permute.xlu0 %1540
        %1542 = vrot.lane.b32.xlu0 %v1319, 80
        %v1543 = vpop.permute.xlu0 %1542
        %v1545 = vsel %vm536, %v1541, 0
        %v1548 = vsel %vm536, %v1543, 0
        %1550 = vmatprep.subr.bf16.mxu0 0
        %1551 = vmatpush1.bf16.xpose.msra.mxu0 %v1548
        %1552 = vmatprep.subr.bf16.mxu0 0
        %1553 = vmatpush1.bf16.xpose.msra.mxu0 0
        %1554 = vmatprep.subr.bf16.mxu0 0
        %1555 = vmatpush1.bf16.xpose.msra.mxu0 0
        %1556 = vmatprep.subr.bf16.mxu0 0
        %1557 = vmatpush1.bf16.xpose.msra.mxu0 0
        %1558 = vmatprep.subr.bf16.mxu0 0
        %1559 = vmatpush1.bf16.xpose.msra.mxu0 0
        %1560 = vmatprep.subr.bf16.mxu0 0
        %1561 = vmatpush1.bf16.xpose.msra.mxu0 0
        %1562 = vmatprep.subr.bf16.mxu0 0
        %1563 = vmatpush1.bf16.xpose.msra.mxu0 0
        %1564 = vmatprep.subr.bf16.mxu0 0
        %1565 = vmatpush1.bf16.xpose.msra.mxu0 0
        %1566 = vmatprep.subr.bf16.mxu0 0
        %1567 = vmatpush1.bf16.xpose.msra.mxu0 0
        %1568 = vmatprep.subr.bf16.mxu0 0
        %1569 = vmatpush1.bf16.xpose.msra.mxu0 0
        %1570 = vmatprep.subr.bf16.mxu0 0
        %1571 = vmatpush1.bf16.xpose.msra.mxu0 0
        %1572 = vmatprep.subr.bf16.mxu0 0
        %1573 = vmatpush1.bf16.xpose.msra.mxu0 0
        %1574 = vmatprep.subr.bf16.mxu0 0
        %1575 = vmatpush1.bf16.xpose.msra.mxu0 0
        %1576 = vmatprep.subr.bf16.mxu0 0
        %1577 = vmatpush1.bf16.xpose.msra.mxu0 0
        %1578 = vmatprep.subr.bf16.mxu0 0
        %1579 = vmatpush1.bf16.xpose.msra.mxu0 0
        %1580 = vmatprep.subr.bf16.mxu0 0
        %1581 = vmatpush1.bf16.xpose.msra.mxu0 0
        %1582 = vmatprep.mubr.bf16.mxu0 0
        %1583 = vmatmul.mubr.bf16.gmra.mrb[0].mxu0 %v1545
        %v1584 = vpop.f32.mrb[0].mxu0
        %v1585 = vadd.f32 0.0, %v1584
        %v1586 = vpop.f32.mrb[0].mxu0
        %v1587 = vpop.f32.mrb[0].mxu0
        %v1588 = vpop.f32.mrb[0].mxu0
        %1589 = vdwg.mxu0
        %v1590 = vsel %vm536, %v1585, -inf
        %1591 = vmax.xlane.f32.xlu0 %v1590
        %v1592 = vpop.xlane.xlu0 %1591
        %v1593 = vsub.f32 %v1585, %v1592
        %v1594 = vmul.f32 %v1593, 1.442695
        %v1595 = vpow.pop %v1594
        %v1596 = vsel %vm536, %v1595, 0.0
        %1597 = vadd.xlane.f32.xlu0 %v1596
        %v1598 = vpop.xlane.xlu0 %1597
        %v1599 = vrcp.pop %v1598
        %v1600 = vmul.f32 %v1595, %v1599
        %v1601 = vpack.c.bf16 %v1600, %v1600
        %1602 = vrot.lane.b32.xlu0 %v1319, 48
        %v1603 = vpop.permute.xlu0 %1602
        %v1605 = vsel %vm536, %v1601, 0
        %v1608 = vsel %vm600, %v1603, 0
        %1610 = vmatprep.subr.bf16.mxu0 0
        %1611 = vmatpush1.bf16.msra.mxu0 %v1608
        %1612 = vmatprep.subr.bf16.mxu0 0
        %1613 = vmatpush1.bf16.msra.mxu0 0
        %1614 = vmatprep.subr.bf16.mxu0 0
        %1615 = vmatpush1.bf16.msra.mxu0 0
        %1616 = vmatprep.subr.bf16.mxu0 0
        %1617 = vmatpush1.bf16.msra.mxu0 0
        %1618 = vmatprep.subr.bf16.mxu0 0
        %1619 = vmatpush1.bf16.msra.mxu0 0
        %1620 = vmatprep.subr.bf16.mxu0 0
        %1621 = vmatpush1.bf16.msra.mxu0 0
        %1622 = vmatprep.subr.bf16.mxu0 0
        %1623 = vmatpush1.bf16.msra.mxu0 0
        %1624 = vmatprep.subr.bf16.mxu0 0
        %1625 = vmatpush1.bf16.msra.mxu0 0
        %1626 = vmatprep.subr.bf16.mxu0 0
        %1627 = vmatpush1.bf16.msra.mxu0 0
        %1628 = vmatprep.subr.bf16.mxu0 0
        %1629 = vmatpush1.bf16.msra.mxu0 0
        %1630 = vmatprep.subr.bf16.mxu0 0
        %1631 = vmatpush1.bf16.msra.mxu0 0
        %1632 = vmatprep.subr.bf16.mxu0 0
        %1633 = vmatpush1.bf16.msra.mxu0 0
        %1634 = vmatprep.subr.bf16.mxu0 0
        %1635 = vmatpush1.bf16.msra.mxu0 0
        %1636 = vmatprep.subr.bf16.mxu0 0
        %1637 = vmatpush1.bf16.msra.mxu0 0
        %1638 = vmatprep.subr.bf16.mxu0 0
        %1639 = vmatpush1.bf16.msra.mxu0 0
        %1640 = vmatprep.subr.bf16.mxu0 0
        %1641 = vmatpush1.bf16.msra.mxu0 0
        %1642 = vmatprep.mubr.bf16.mxu0 0
        %1643 = vmatmul.mubr.bf16.gmra.mrb[0].mxu0 %v1605
        %v1644 = vpop.f32.mrb[0].mxu0
        %v1645 = vadd.f32 0.0, %v1644
        %v1646 = vpop.f32.mrb[0].mxu0
        %v1647 = vpop.f32.mrb[0].mxu0
        %v1648 = vpop.f32.mrb[0].mxu0
        %1649 = vdwg.mxu0
        %1650 = vrot.lane.b32.xlu0 %v1318, 104
        %v1651 = vpop.permute.xlu0 %1650
        %1652 = vrot.lane.b32.xlu0 %v1319, 72
        %v1653 = vpop.permute.xlu0 %1652
        %v1655 = vsel %vm536, %v1651, 0
        %v1658 = vsel %vm536, %v1653, 0
        %1660 = vmatprep.subr.bf16.mxu0 0
        %1661 = vmatpush1.bf16.xpose.msra.mxu0 %v1658
        %1662 = vmatprep.subr.bf16.mxu0 0
        %1663 = vmatpush1.bf16.xpose.msra.mxu0 0
        %1664 = vmatprep.subr.bf16.mxu0 0
        %1665 = vmatpush1.bf16.xpose.msra.mxu0 0
        %1666 = vmatprep.subr.bf16.mxu0 0
        %1667 = vmatpush1.bf16.xpose.msra.mxu0 0
        %1668 = vmatprep.subr.bf16.mxu0 0
        %1669 = vmatpush1.bf16.xpose.msra.mxu0 0
        %1670 = vmatprep.subr.bf16.mxu0 0
        %1671 = vmatpush1.bf16.xpose.msra.mxu0 0
        %1672 = vmatprep.subr.bf16.mxu0 0
        %1673 = vmatpush1.bf16.xpose.msra.mxu0 0
        %1674 = vmatprep.subr.bf16.mxu0 0
        %1675 = vmatpush1.bf16.xpose.msra.mxu0 0
        %1676 = vmatprep.subr.bf16.mxu0 0
        %1677 = vmatpush1.bf16.xpose.msra.mxu0 0
        %1678 = vmatprep.subr.bf16.mxu0 0
        %1679 = vmatpush1.bf16.xpose.msra.mxu0 0
        %1680 = vmatprep.subr.bf16.mxu0 0
        %1681 = vmatpush1.bf16.xpose.msra.mxu0 0
        %1682 = vmatprep.subr.bf16.mxu0 0
        %1683 = vmatpush1.bf16.xpose.msra.mxu0 0
        %1684 = vmatprep.subr.bf16.mxu0 0
        %1685 = vmatpush1.bf16.xpose.msra.mxu0 0
        %1686 = vmatprep.subr.bf16.mxu0 0
        %1687 = vmatpush1.bf16.xpose.msra.mxu0 0
        %1688 = vmatprep.subr.bf16.mxu0 0
        %1689 = vmatpush1.bf16.xpose.msra.mxu0 0
        %1690 = vmatprep.subr.bf16.mxu0 0
        %1691 = vmatpush1.bf16.xpose.msra.mxu0 0
        %1692 = vmatprep.mubr.bf16.mxu0 0
        %1693 = vmatmul.mubr.bf16.gmra.mrb[0].mxu0 %v1655
        %v1694 = vpop.f32.mrb[0].mxu0
        %v1695 = vadd.f32 0.0, %v1694
        %v1696 = vpop.f32.mrb[0].mxu0
        %v1697 = vpop.f32.mrb[0].mxu0
        %v1698 = vpop.f32.mrb[0].mxu0
        %1699 = vdwg.mxu0
        %v1700 = vsel %vm536, %v1695, -inf
        %1701 = vmax.xlane.f32.xlu0 %v1700
        %v1702 = vpop.xlane.xlu0 %1701
        %v1703 = vsub.f32 %v1695, %v1702
        %v1704 = vmul.f32 %v1703, 1.442695
        %v1705 = vpow.pop %v1704
        %v1706 = vsel %vm536, %v1705, 0.0
        %1707 = vadd.xlane.f32.xlu0 %v1706
        %v1708 = vpop.xlane.xlu0 %1707
        %v1709 = vrcp.pop %v1708
        %v1710 = vmul.f32 %v1705, %v1709
        %v1711 = vpack.c.bf16 %v1710, %v1710
        %1712 = vrot.lane.b32.xlu0 %v1319, 40
        %v1713 = vpop.permute.xlu0 %1712
        %v1715 = vsel %vm536, %v1711, 0
        %v1718 = vsel %vm600, %v1713, 0
        %1720 = vmatprep.subr.bf16.mxu0 0
        %1721 = vmatpush1.bf16.msra.mxu0 %v1718
        %1722 = vmatprep.subr.bf16.mxu0 0
        %1723 = vmatpush1.bf16.msra.mxu0 0
        %1724 = vmatprep.subr.bf16.mxu0 0
        %1725 = vmatpush1.bf16.msra.mxu0 0
        %1726 = vmatprep.subr.bf16.mxu0 0
        %1727 = vmatpush1.bf16.msra.mxu0 0
        %1728 = vmatprep.subr.bf16.mxu0 0
        %1729 = vmatpush1.bf16.msra.mxu0 0
        %1730 = vmatprep.subr.bf16.mxu0 0
        %1731 = vmatpush1.bf16.msra.mxu0 0
        %1732 = vmatprep.subr.bf16.mxu0 0
        %1733 = vmatpush1.bf16.msra.mxu0 0
        %1734 = vmatprep.subr.bf16.mxu0 0
        %1735 = vmatpush1.bf16.msra.mxu0 0
        %1736 = vmatprep.subr.bf16.mxu0 0
        %1737 = vmatpush1.bf16.msra.mxu0 0
        %1738 = vmatprep.subr.bf16.mxu0 0
        %1739 = vmatpush1.bf16.msra.mxu0 0
        %1740 = vmatprep.subr.bf16.mxu0 0
        %1741 = vmatpush1.bf16.msra.mxu0 0
        %1742 = vmatprep.subr.bf16.mxu0 0
        %1743 = vmatpush1.bf16.msra.mxu0 0
        %1744 = vmatprep.subr.bf16.mxu0 0
        %1745 = vmatpush1.bf16.msra.mxu0 0
        %1746 = vmatprep.subr.bf16.mxu0 0
        %1747 = vmatpush1.bf16.msra.mxu0 0
        %1748 = vmatprep.subr.bf16.mxu0 0
        %1749 = vmatpush1.bf16.msra.mxu0 0
        %1750 = vmatprep.subr.bf16.mxu0 0
        %1751 = vmatpush1.bf16.msra.mxu0 0
        %1752 = vmatprep.mubr.bf16.mxu0 0
        %1753 = vmatmul.mubr.bf16.gmra.mrb[0].mxu0 %v1715
        %v1754 = vpop.f32.mrb[0].mxu0
        %v1755 = vadd.f32 0.0, %v1754
        %v1756 = vpop.f32.mrb[0].mxu0
        %v1757 = vpop.f32.mrb[0].mxu0
        %v1758 = vpop.f32.mrb[0].mxu0
        %1759 = vdwg.mxu0
        %1761 = vrot.lane.b32.xlu0 %v1535, 8
        %v1762 = vpop.permute.xlu0 %1761
        %1765 = vrot.lane.b32.xlu0 %v1645, 16
        %v1766 = vpop.permute.xlu0 %1765
        %1769 = vrot.lane.b32.xlu0 %v1755, 24
        %v1770 = vpop.permute.xlu0 %1769
        %v1772 = vsel %vm536, %v1424, %v1762
        %v1773 = vsel %vm988, %v1772, %v1766
        %v1774 = vsel %vm990, %v1773, %v1770
        %v1775 = vpack.c.bf16 %v1774, %v1774
        %s1776 = scalar_lea.vmem %s4, 16
        %v1777 = vld [vmem:[%s1776] sm:$0xf]
        %v1778 = vld [vmem:[%s1776 + $0x4] sm:$0xf]
        %v1779 = vld [vmem:[%s1776 + $0x8] sm:$0xf]
        %v1780 = vld [vmem:[%s1776 + $0xc] sm:$0xf]
        %v1781 = vlaneseq
        %v1782 = vshrl.u32 %v1781, 7
        %v1783 = vsub.s32 1, %v1782
        %v1784 = vrot.slane %v1251, %v1783
        %v1789 = vunpack.c.l.b16 %v1777
        %v1790 = vunpack.c.l.b16 %v1778
        %v1791 = vunpack.c.l.b16 %v1779
        %v1792 = vunpack.c.l.b16 %v1780
        %v1793 = vpack.c.b16 %v1790, %v1789
        %v1794 = vpack.c.b16 %v1792, %v1791
        %v1798 = vsel %vm486, %v1775, 0
        %1800 = vmatprep.subr.bf16.mxu0 0
        %1801 = vmatpush1.bf16.msra.mxu0 %v1793
        %1802 = vmatprep.subr.bf16.mxu0 0
        %1803 = vmatpush1.bf16.msra.mxu0 %v1794
        %1804 = vmatprep.subr.bf16.mxu0 0
        %1805 = vmatpush1.bf16.msra.mxu0 0
        %1806 = vmatprep.subr.bf16.mxu0 0
        %1807 = vmatpush1.bf16.msra.mxu0 0
        %1808 = vmatprep.subr.bf16.mxu0 0
        %1809 = vmatpush1.bf16.msra.mxu0 0
        %1810 = vmatprep.subr.bf16.mxu0 0
        %1811 = vmatpush1.bf16.msra.mxu0 0
        %1812 = vmatprep.subr.bf16.mxu0 0
        %1813 = vmatpush1.bf16.msra.mxu0 0
        %1814 = vmatprep.subr.bf16.mxu0 0
        %1815 = vmatpush1.bf16.msra.mxu0 0
        %1816 = vmatprep.subr.bf16.mxu0 0
        %1817 = vmatpush1.bf16.msra.mxu0 0
        %1818 = vmatprep.subr.bf16.mxu0 0
        %1819 = vmatpush1.bf16.msra.mxu0 0
        %1820 = vmatprep.subr.bf16.mxu0 0
        %1821 = vmatpush1.bf16.msra.mxu0 0
        %1822 = vmatprep.subr.bf16.mxu0 0
        %1823 = vmatpush1.bf16.msra.mxu0 0
        %1824 = vmatprep.subr.bf16.mxu0 0
        %1825 = vmatpush1.bf16.msra.mxu0 0
        %1826 = vmatprep.subr.bf16.mxu0 0
        %1827 = vmatpush1.bf16.msra.mxu0 0
        %1828 = vmatprep.subr.bf16.mxu0 0
        %1829 = vmatpush1.bf16.msra.mxu0 0
        %1830 = vmatprep.subr.bf16.mxu0 0
        %1831 = vmatpush1.bf16.msra.mxu0 0
        %1832 = vmatprep.mubr.bf16.mxu0 0
        %1833 = vmatmul.mubr.bf16.gmra.mrb[0].mxu0 %v1798
        %v1834 = vpop.f32.mrb[0].mxu0
        %v1835 = vadd.f32 %v1784, %v1834
        %v1836 = vpop.f32.mrb[0].mxu0
        %v1837 = vpop.f32.mrb[0].mxu0
        %v1838 = vpop.f32.mrb[0].mxu0
        %1839 = vdwg.mxu0
        %v1840 = vadd.f32 %v1249, %v1835
        %v1841 = vsel %vm486, %v1840, 0.0
        %1842 = vadd.xlane.f32.xlu0 %v1841
        %v1843 = vpop.xlane.xlu0 %1842
        %v1844 = vmul.f32 %v1843, %v1060
        %v1845 = vsub.f32 %v1840, %v1844
        %v1846 = vmul.f32 %v1845, %v1845
        %v1847 = vsel %vm486, %v1846, 0.0
        %1848 = vadd.xlane.f32.xlu0 %v1847
        %v1849 = vpop.xlane.xlu0 %1848
        %v1850 = vmul.f32 %v1849, %v1060
        %v1851 = vadd.f32 %v1850, 1e-05
        %v1852 = vrsqrt.pop %v1851
        %v1853 = vmul.f32 %v1845, %v1852
        %v1854 = vlaneseq
        %v1855 = vshrl.u32 %v1854, 7
        %v1856 = vsub.s32 4, %v1855
        %v1857 = vrot.slane %v1251, %v1856
        %v1858 = vmul.f32 %v1853, %v1857
        %v1859 = vlaneseq
        %v1860 = vshrl.u32 %v1859, 7
        %v1861 = vsub.s32 5, %v1860
        %v1862 = vrot.slane %v1251, %v1861
        %v1863 = vadd.f32 %v1858, %v1862
        %v1864 = vpack.c.bf16 %v1863, %v1863
        %s1865 = scalar_lea.vmem %s5, 16
        %v1866 = vld [vmem:[%s1865] sm:$0xf]
        %v1867 = vld [vmem:[%s1865 + $0x4] sm:$0xf]
        %v1868 = vld [vmem:[%s1865 + $0x8] sm:$0xf]
        %v1869 = vld [vmem:[%s1865 + $0xc] sm:$0xf]
        %v1870 = vlaneseq
        %v1871 = vshrl.u32 %v1870, 7
        %v1872 = vsub.s32 2, %v1871
        %v1873 = vrot.slane %v1251, %v1872
        %v1878 = vunpack.c.l.b16 %v1866
        %v1879 = vunpack.c.l.b16 %v1867
        %v1880 = vunpack.c.l.b16 %v1868
        %v1881 = vunpack.c.l.b16 %v1869
        %v1882 = vpack.c.b16 %v1879, %v1878
        %v1883 = vpack.c.b16 %v1881, %v1880
        %v1887 = vsel %vm486, %v1864, 0
        %1889 = vmatprep.subr.bf16.mxu0 0
        %1890 = vmatpush1.bf16.msra.mxu0 %v1882
        %1891 = vmatprep.subr.bf16.mxu0 0
        %1892 = vmatpush1.bf16.msra.mxu0 %v1883
        %1893 = vmatprep.subr.bf16.mxu0 0
        %1894 = vmatpush1.bf16.msra.mxu0 0
        %1895 = vmatprep.subr.bf16.mxu0 0
        %1896 = vmatpush1.bf16.msra.mxu0 0
        %1897 = vmatprep.subr.bf16.mxu0 0
        %1898 = vmatpush1.bf16.msra.mxu0 0
        %1899 = vmatprep.subr.bf16.mxu0 0
        %1900 = vmatpush1.bf16.msra.mxu0 0
        %1901 = vmatprep.subr.bf16.mxu0 0
        %1902 = vmatpush1.bf16.msra.mxu0 0
        %1903 = vmatprep.subr.bf16.mxu0 0
        %1904 = vmatpush1.bf16.msra.mxu0 0
        %1905 = vmatprep.subr.bf16.mxu0 0
        %1906 = vmatpush1.bf16.msra.mxu0 0
        %1907 = vmatprep.subr.bf16.mxu0 0
        %1908 = vmatpush1.bf16.msra.mxu0 0
        %1909 = vmatprep.subr.bf16.mxu0 0
        %1910 = vmatpush1.bf16.msra.mxu0 0
        %1911 = vmatprep.subr.bf16.mxu0 0
        %1912 = vmatpush1.bf16.msra.mxu0 0
        %1913 = vmatprep.subr.bf16.mxu0 0
        %1914 = vmatpush1.bf16.msra.mxu0 0
        %1915 = vmatprep.subr.bf16.mxu0 0
        %1916 = vmatpush1.bf16.msra.mxu0 0
        %1917 = vmatprep.subr.bf16.mxu0 0
        %1918 = vmatpush1.bf16.msra.mxu0 0
        %1919 = vmatprep.subr.bf16.mxu0 0
        %1920 = vmatpush1.bf16.msra.mxu0 0
        %1921 = vmatprep.mubr.bf16.mxu0 0
        %1922 = vmatmul.mubr.bf16.gmra.mrb[0].mxu0 %v1887
        %v1923 = vpop.f32.mrb[0].mxu0
        %v1924 = vadd.f32 %v1873, %v1923
        %v1925 = vpop.f32.mrb[0].mxu0
        %v1926 = vpop.f32.mrb[0].mxu0
        %v1927 = vpop.f32.mrb[0].mxu0
        %1928 = vdwg.mxu0
        %v1929 = vmax.f32 %v1924, 0.0
        %v1930 = vpack.c.bf16 %v1929, %v1929
        %s1931 = scalar_lea.vmem %s6, 32
        %v1932 = vld [vmem:[%s1931] sm:$0xf]
        %v1933 = vld [vmem:[%s1931 + $0x4] sm:$0xf]
        %v1934 = vld [vmem:[%s1931 + $0x8] sm:$0xf]
        %v1935 = vld [vmem:[%s1931 + $0xc] sm:$0xf]
        %v1936 = vld [vmem:[%s1931 + $0x10] sm:$0xf]
        %v1937 = vld [vmem:[%s1931 + $0x14] sm:$0xf]
        %v1938 = vld [vmem:[%s1931 + $0x18] sm:$0xf]
        %v1939 = vld [vmem:[%s1931 + $0x1c] sm:$0xf]
        %v1940 = vlaneseq
        %v1941 = vshrl.u32 %v1940, 7
        %v1942 = vsub.s32 3, %v1941
        %v1943 = vrot.slane %v1251, %v1942
        %v1952 = vunpack.c.l.b16 %v1932
        %v1953 = vunpack.c.l.b16 %v1933
        %v1954 = vunpack.c.l.b16 %v1934
        %v1955 = vunpack.c.l.b16 %v1935
        %v1956 = vunpack.c.l.b16 %v1936
        %v1957 = vunpack.c.l.b16 %v1937
        %v1958 = vunpack.c.l.b16 %v1938
        %v1959 = vunpack.c.l.b16 %v1939
        %v1960 = vpack.c.b16 %v1953, %v1952
        %v1961 = vpack.c.b16 %v1955, %v1954
        %v1962 = vpack.c.b16 %v1957, %v1956
        %v1963 = vpack.c.b16 %v1959, %v1958
        %v1969 = vsel %vm390, %v1930, 0
        %1971 = vmatprep.subr.bf16.mxu0 0
        %1972 = vmatpush1.bf16.msra.mxu0 %v1960
        %1973 = vmatprep.subr.bf16.mxu0 0
        %1974 = vmatpush1.bf16.msra.mxu0 %v1961
        %1975 = vmatprep.subr.bf16.mxu0 0
        %1976 = vmatpush1.bf16.msra.mxu0 %v1962
        %1977 = vmatprep.subr.bf16.mxu0 0
        %1978 = vmatpush1.bf16.msra.mxu0 %v1963
        %1979 = vmatprep.subr.bf16.mxu0 0
        %1980 = vmatpush1.bf16.msra.mxu0 0
        %1981 = vmatprep.subr.bf16.mxu0 0
        %1982 = vmatpush1.bf16.msra.mxu0 0
        %1983 = vmatprep.subr.bf16.mxu0 0
        %1984 = vmatpush1.bf16.msra.mxu0 0
        %1985 = vmatprep.subr.bf16.mxu0 0
        %1986 = vmatpush1.bf16.msra.mxu0 0
        %1987 = vmatprep.subr.bf16.mxu0 0
        %1988 = vmatpush1.bf16.msra.mxu0 0
        %1989 = vmatprep.subr.bf16.mxu0 0
        %1990 = vmatpush1.bf16.msra.mxu0 0
        %1991 = vmatprep.subr.bf16.mxu0 0
        %1992 = vmatpush1.bf16.msra.mxu0 0
        %1993 = vmatprep.subr.bf16.mxu0 0
        %1994 = vmatpush1.bf16.msra.mxu0 0
        %1995 = vmatprep.subr.bf16.mxu0 0
        %1996 = vmatpush1.bf16.msra.mxu0 0
        %1997 = vmatprep.subr.bf16.mxu0 0
        %1998 = vmatpush1.bf16.msra.mxu0 0
        %1999 = vmatprep.subr.bf16.mxu0 0
        %2000 = vmatpush1.bf16.msra.mxu0 0
        %2001 = vmatprep.subr.bf16.mxu0 0
        %2002 = vmatpush1.bf16.msra.mxu0 0
        %2003 = vmatprep.mubr.bf16.mxu0 0
        %2004 = vmatmul.mubr.bf16.gmra.mrb[0].mxu0 %v1969
        %v2005 = vpop.f32.mrb[0].mxu0
        %v2006 = vadd.f32 %v1943, %v2005
        %v2007 = vpop.f32.mrb[0].mxu0
        %v2008 = vpop.f32.mrb[0].mxu0
        %v2009 = vpop.f32.mrb[0].mxu0
        %2010 = vdwg.mxu0
        %v2011 = vadd.f32 %v1863, %v2006
        %v2012 = vsel %vm486, %v2011, 0.0
        %2013 = vadd.xlane.f32.xlu0 %v2012
        %v2014 = vpop.xlane.xlu0 %2013
        %v2015 = vmul.f32 %v2014, %v1060
        %v2016 = vsub.f32 %v2011, %v2015
        %v2017 = vmul.f32 %v2016, %v2016
        %v2018 = vsel %vm486, %v2017, 0.0
        %2019 = vadd.xlane.f32.xlu0 %v2018
        %v2020 = vpop.xlane.xlu0 %2019
        %v2021 = vmul.f32 %v2020, %v1060
        %v2022 = vadd.f32 %v2021, 1e-05
        %v2023 = vrsqrt.pop %v2022
        %v2024 = vmul.f32 %v2016, %v2023
        %v2025 = vlaneseq
        %v2026 = vshrl.u32 %v2025, 7
        %v2027 = vsub.s32 6, %v2026
        %v2028 = vrot.slane %v1251, %v2027
        %v2029 = vmul.f32 %v2024, %v2028
        %v2030 = vlaneseq
        %v2031 = vshrl.u32 %v2030, 7
        %v2032 = vsub.s32 7, %v2031
        %v2033 = vrot.slane %v1251, %v2032
        %v2034 = vadd.f32 %v2029, %v2033
        %v2035 = vpack.c.bf16 %v2034, %v2034
        %v2036 = vld [vmem:[%s8] sm:$0xf]
        %v2037 = vld [vmem:[%s8 + $0x4] sm:$0xf]
        %v2038 = vld [vmem:[%s8 + $0x8] sm:$0xf]
        %v2039 = vld [vmem:[%s8 + $0xc] sm:$0xf]
        %v2040 = vld [vmem:[%s9] sm:$0x1]
        %v2042 = vlaneseq
        %v2043 = vshrl.u32 %v2042, 7
        %v2044 = vsub.s32 0, %v2043
        %v2045 = vrot.slane %v2040, %v2044
        %v2051 = vunpack.c.l.b16 %v2036
        %v2052 = vunpack.c.l.b16 %v2037
        %v2053 = vunpack.c.l.b16 %v2038
        %v2054 = vunpack.c.l.b16 %v2039
        %v2055 = vpack.c.b16 %v2052, %v2051
        %v2056 = vpack.c.b16 %v2054, %v2053
        %v2060 = vsel %vm486, %v2035, 0
        %2062 = vmatprep.subr.bf16.mxu0 0
        %2063 = vmatpush1.bf16.msra.mxu0 %v2055
        %2064 = vmatprep.subr.bf16.mxu0 0
        %2065 = vmatpush1.bf16.msra.mxu0 %v2056
        %2066 = vmatprep.subr.bf16.mxu0 0
        %2067 = vmatpush1.bf16.msra.mxu0 0
        %2068 = vmatprep.subr.bf16.mxu0 0
        %2069 = vmatpush1.bf16.msra.mxu0 0
        %2070 = vmatprep.subr.bf16.mxu0 0
        %2071 = vmatpush1.bf16.msra.mxu0 0
        %2072 = vmatprep.subr.bf16.mxu0 0
        %2073 = vmatpush1.bf16.msra.mxu0 0
        %2074 = vmatprep.subr.bf16.mxu0 0
        %2075 = vmatpush1.bf16.msra.mxu0 0
        %2076 = vmatprep.subr.bf16.mxu0 0
        %2077 = vmatpush1.bf16.msra.mxu0 0
        %2078 = vmatprep.subr.bf16.mxu0 0
        %2079 = vmatpush1.bf16.msra.mxu0 0
        %2080 = vmatprep.subr.bf16.mxu0 0
        %2081 = vmatpush1.bf16.msra.mxu0 0
        %2082 = vmatprep.subr.bf16.mxu0 0
        %2083 = vmatpush1.bf16.msra.mxu0 0
        %2084 = vmatprep.subr.bf16.mxu0 0
        %2085 = vmatpush1.bf16.msra.mxu0 0
        %2086 = vmatprep.subr.bf16.mxu0 0
        %2087 = vmatpush1.bf16.msra.mxu0 0
        %2088 = vmatprep.subr.bf16.mxu0 0
        %2089 = vmatpush1.bf16.msra.mxu0 0
        %2090 = vmatprep.subr.bf16.mxu0 0
        %2091 = vmatpush1.bf16.msra.mxu0 0
        %2092 = vmatprep.subr.bf16.mxu0 0
        %2093 = vmatpush1.bf16.msra.mxu0 0
        %2094 = vmatprep.mubr.bf16.mxu0 0
        %2095 = vmatmul.mubr.bf16.gmra.mrb[0].mxu0 %v2060
        %v2096 = vpop.f32.mrb[0].mxu0
        %v2097 = vadd.f32 %v2045, %v2096
        %v2098 = vpop.f32.mrb[0].mxu0
        %v2099 = vpop.f32.mrb[0].mxu0
        %v2100 = vpop.f32.mrb[0].mxu0
        %2101 = vdwg.mxu0
        %2102 = vst [vmem:[%s363] sm:$0xff] %v2097
        %s2103 = sand.u32 %s252, 1
        %s2104 = scalar_lea.sflag [#allocation3], %s2103
        %s2105 = sand.u32 %s252, 1
        %s2106 = smul.addr %s2105, 8
        %s2107 = scalar_lea.vmem [#allocation2], %s2106
        // Predicated region
        $region61: #{_lambda_.1} parent=59 // pred_check
          %p2108 = pneg %p262
        $region62: #{_lambda_.1} parent=59 // pred_check_branch
          %2110 = sbr.rel (%p2108) target = $region64
        $region63: #{_lambda_.1} parent=59 // pred_region
          %s2112 = ssub.s32 128, 128
          %2113 = vsyncadd %s2104, %s2112
          %s2114 = smul.addr %s24, 128
          %s2115 = scalar_lea.hbm %s10, %s2114
          %s2117 = sshll.u32 %s2107, 4
          %s2118 = int_to_ptr.vmem [resolvable:$true] %s2117
          %2120 = dma.vmem_to_hbm [thread:$0]  %s2118, 128, %s2115, %s2104
        $region64: #{_lambda_.1} parent=59 // pred_fallthru
          _
      $region60: #{_lambda_.1} parent=5 // pred_fallthru
        _
      %p2121 = scmp.le.s32.totalorder 2, %s19
      // Predicated region
      $region65: #{_lambda_.1} parent=5 // pred_check
        %p2122 = pneg %p2121
      $region66: #{_lambda_.1} parent=5 // pred_check_branch
        %2124 = sbr.rel (%p2122) target = $region68
      $region67: #{_lambda_.1} parent=5 // pred_region
        %s2125 = ssub.s32 %s19, 2
        // Predicated region
        $region69: #{_lambda_.1} parent=67 // pred_check
          %p2126 = pneg %p268
        $region70: #{_lambda_.1} parent=67 // pred_check_branch
          %2128 = sbr.rel (%p2126) target = $region72
        $region71: #{_lambda_.1} parent=67 // pred_region
          %s2129 = sand.u32 %s253, 1
          %s2130 = scalar_lea.sflag [#allocation3], %s2129
          %s2131 = sand.u32 %s253, 1
          %s2132 = smul.addr %s2131, 8
          %s2133 = scalar_lea.vmem [#allocation2], %s2132
          %2134 = dma.done %s2130, 128
        $region72: #{_lambda_.1} parent=67 // pred_fallthru
          _
      $region68: #{_lambda_.1} parent=5 // pred_fallthru
        _
    $region6: #{_lambda_.1} parent=1 // loop_footer
      %s23 = sadd.s32 1, %s19
    $region7: #{_lambda_.1} parent=1 // loop_footer_branch
      %18 = sbr.rel target = $region3
    $region8: #{_lambda_.1} parent=1 // loop_exit
      _
    %2135 = vsyncpa [#allocation3], 1
    %s2136 = scalar_lea.sflag [#allocation3], 1
    %2137 = vsyncpa %s2136, 1

</llo_original>
